<compile_context>
chip_gen: v7x
topology: tpu7x:2x2x1
jax: 0.10.0
libtpu: 0.0.40
codegen_flags: <defaults>
</compile_context>

<pallas_src>
import functools

import jax
import jax.numpy as jnp
import numpy as np
from jax.experimental import pallas as pl
from jax.experimental.pallas import tpu as pltpu

GCN_LEVELS = 5
LANE = 128


# --------------------------------------------------------------------------- kernels
def gcn_stack_kernel(a_ref, xt_ref, w1_ref, wr_ref, b_ref, out_ref, *, n_valid):
    """One edge-attr channel: 5 chained GCNConv levels -> [5, n_pad] (lane-dense).

    a_ref holds the PRE-NORMALIZED, TRANSPOSED adjacency
        a_norm_t[src, dst] = dinv[src] * (A + I)[dst, src] * dinv[dst]
    zero-padded to n_pad on both axes, so each propagate is a bare row-vector matmul.
    Pad lanes of the sort-key row (level 4) are written as -inf so they land at the tail
    of the descending global_sort_pool order; other rows' pad lanes are don't-care.
    """
    i = pl.program_id(0)
    a_norm = a_ref[0]                                     # [n_pad, n_pad]
    x_t = xt_ref[...]                                     # [F, n_pad] (zero pad lanes)
    w1 = w1_ref[i]                                        # [1, F]
    wr = wr_ref[i]                                        # [1, 4]
    b = b_ref[i]                                          # [1, 5]

    n_pad = a_norm.shape[-1]
    lane = jax.lax.broadcasted_iota(jnp.int32, (1, n_pad), 1)
    valid = lane < n_valid

    h = jnp.dot(w1, x_t, preferred_element_type=jnp.float32)        # (X @ W1)^T -> [1, n_pad]
    h = jnp.dot(h, a_norm, preferred_element_type=jnp.float32) + b[:, 0:1]
    out_ref[0, 0:1, :] = h
    for k in range(GCN_LEVELS - 1):
        h = jnp.dot(h * wr[:, k:k + 1], a_norm,
                    preferred_element_type=jnp.float32) + b[:, k + 1:k + 2]
        if k == GCN_LEVELS - 2:
            # sort-key row: -inf in pad lanes -> they sort to the back (descending order)
            out_ref[0, k + 1:k + 2, :] = jnp.where(valid, h, -jnp.inf)
        else:
            out_ref[0, k + 1:k + 2, :] = h


def _conv1d_mxu(x, w_mat, b_col, ksz):
    """'valid' Conv1d along lanes as ONE small MXU matmul.

    x: [in_ch, n_pad]. The ksz rolled copies (rolled_k[i, t] = x[i, t+k], wraps in the
    invalid tail) are stacked on sublanes -> [ksz*in_ch, n_pad]; w_mat[o, k*in_ch + i]
    = conv_w[o, i, k]; b_col: [out_ch, 1]. Lanes past the valid length are garbage and
    are masked / zero-weighted downstream.
    """
    n_pad = x.shape[-1]
    stacked = jnp.concatenate(
        [x] + [pltpu.roll(x, n_pad - k, axis=1) for k in range(1, ksz)], axis=0)
    return jnp.dot(w_mat, stacked, preferred_element_type=jnp.float32) + b_col


def _maxpool3(x):
    """MaxPool1d(kernel=3, stride=1) over lanes, full-width via XLU rolls."""
    n_pad = x.shape[-1]
    return jnp.maximum(jnp.maximum(x, pltpu.roll(x, n_pad - 1, axis=1)),
                       pltpu.roll(x, n_pad - 2, axis=1))


def conv_mlp_kernel(xs_ref, c1w_ref, c1b_ref, c2w_ref, c2b_ref,
                    f1w_ref, f1b_ref, f2w_ref, f2b_ref, f3w_ref, f3b_ref,
                    out_ref, acc_ref, *, n_valid):
    """Per-channel Conv1d(5->3,k3) -> MaxPool(3,1) -> Conv1d(3->1,k3) -> MaxPool(3,1),
    fused with the fc1 contraction (accumulated across the channel grid axis in a VMEM
    scratch) and the fc2/fc3 head executed on the last channel.

    All weight refs hold EVERY channel (constant index_map -> resident, 0 DMAs after the
    first step) and are indexed by pl.program_id here.
    """
    i = pl.program_id(0)

    @pl.when(i == 0)
    def _init():
        acc_ref[...] = jnp.zeros_like(acc_ref)

    xs = xs_ref[0]                                        # [5, n_pad], sorted nodes on lanes
    n_pad = xs.shape[-1]

    out1 = _conv1d_mxu(xs, c1w_ref[i], c1b_ref[i], ksz=3)     # [3, n_pad], valid: n_valid-2
    mp1 = _maxpool3(out1)                                     # valid: n_valid-4
    out2 = _conv1d_mxu(mp1, c2w_ref[i], c2b_ref[i], ksz=3)    # [1, n_pad], valid: n_valid-6
    mp2 = _maxpool3(out2)                                     # valid: n_valid-8

    # Zero the wrapped/padded tail (roll wrap lanes contain garbage / +-inf); the f1w rows
    # past n_valid-8 are also zero, so either mechanism alone is sufficient.
    lane = jax.lax.broadcasted_iota(jnp.int32, (1, n_pad), 1)
    mp2 = jnp.where(lane < n_valid - 8, mp2, 0.0)

    # fc1 partial product for this channel (this channel's fc1 rows, zero-padded to n_pad).
    acc_ref[...] += jnp.dot(mp2, f1w_ref[i], preferred_element_type=jnp.float32)

    # NOTE: out_ref is only written on the last channel; correct because the output
    # BlockSpec uses a constant index_map (resident block, single final writeback).
    @pl.when(i == pl.num_programs(0) - 1)
    def _head():
        def elu(v):
            return jnp.where(v > 0, v, jnp.exp(jnp.minimum(v, 0.0)) - 1.0)
        h = elu(acc_ref[...] + f1b_ref[...])
        h = elu(jnp.dot(h, f2w_ref[...], preferred_element_type=jnp.float32) + f2b_ref[...])
        out_ref[...] = jnp.dot(h, f3w_ref[...],
                               preferred_element_type=jnp.float32) + f3b_ref[...]


# --------------------------------------------------------------------------- glue
def build_norm_adjacency_t(edge_index, edge_attr, num_nodes, n_pad):
    """Transposed dense adjacency with self loops, symmetric-normalized once in XLA and
    zero-padded to n_pad on both axes: a_norm_t[c, src, dst]."""
    src, dst = edge_index[0], edge_index[1]
    c = edge_attr.shape[1]
    a_t = jnp.zeros((c, num_nodes, num_nodes), jnp.float32)
    a_t = a_t.at[:, src, dst].add(edge_attr.T.astype(jnp.float32))
    a_t = a_t + jnp.eye(num_nodes, dtype=jnp.float32)[None]
    deg = jnp.sum(a_t, axis=1)                                    # [C, N] (dst in-degree)
    dinv = jnp.where(deg > 0, deg ** -0.5, 0.0)
    a_norm_t = dinv[:, :, None] * a_t * dinv[:, None, :]
    return jnp.pad(a_norm_t,
                   ((0, 0), (0, n_pad - num_nodes), (0, n_pad - num_nodes)))


def dgcnn2_forward(x, edge_index, edge_attr, params):
    n, f = x.shape
    c = edge_attr.shape[1]
    n_pad = ((n + LANE - 1) // LANE) * LANE

    a_norm_t = build_norm_adjacency_t(edge_index, edge_attr, n, n_pad)   # [C, n_pad, n_pad]
    x_t = jnp.pad(x.T.astype(jnp.float32), ((0, 0), (0, n_pad - n)))     # [F, n_pad]

    # --- per-channel 5-level GCN stack -> [C, 5, n_pad] (levels on sublanes, nodes on lanes)
    xx = pl.pallas_call(
        functools.partial(gcn_stack_kernel, n_valid=n),
        out_shape=jax.ShapeDtypeStruct((c, GCN_LEVELS, n_pad), jnp.float32),
        grid=(c,),
        in_specs=[
            pl.BlockSpec((1, n_pad, n_pad), lambda i: (i, 0, 0)),
            pl.BlockSpec((f, n_pad), lambda i: (0, 0)),
            pl.BlockSpec((c, 1, f), lambda i: (0, 0, 0)),                # resident
            pl.BlockSpec((c, 1, GCN_LEVELS - 1), lambda i: (0, 0, 0)),   # resident
            pl.BlockSpec((c, 1, GCN_LEVELS), lambda i: (0, 0, 0)),       # resident
        ],
        out_specs=pl.BlockSpec((1, GCN_LEVELS, n_pad), lambda i: (i, 0, 0)),
        compiler_params=pltpu.CompilerParams(dimension_semantics=("parallel",)),
    )(a_norm_t, x_t, params["gcn_w1"], params["gcn_wr"], params["gcn_b"])

    # --- global_sort_pool(k=num_nodes): sort lanes by last GCN level, descending.
    # Pad-lane keys are -inf, so the padded lanes fall to the end of the order.
    perm = jnp.argsort(-xx[:, GCN_LEVELS - 1, :], axis=-1)               # [C, n_pad]
    xs = jnp.take_along_axis(xx, perm[:, None, :], axis=2)               # [C, 5, n_pad]

    # Static weight re-layouts for the fused conv+MLP kernel.
    # conv*_w: [C, out, in, k] -> [C, out, k*in]  (matches the sublane-stacked rolled taps)
    c1w = params["conv1_w"].transpose(0, 1, 3, 2).reshape(c, 3, 3 * GCN_LEVELS)
    c1b = params["conv1_b"].reshape(c, 3, 1)
    c2w = params["conv2_w"].transpose(0, 1, 3, 2).reshape(c, 1, 3 * 3)
    c2b = params["conv2_b"].reshape(c, 1, 1)
    f1w = jnp.pad(params["fc1_w"].reshape(c, n - 8, 32),
                  ((0, 0), (0, n_pad - (n - 8)), (0, 0)))                # [C, n_pad, 32]

    # --- fused Conv1d/MaxPool1d stack + fc1 accumulation + fc2/fc3 head (one launch) ---
    out = pl.pallas_call(
        functools.partial(conv_mlp_kernel, n_valid=n),
        out_shape=jax.ShapeDtypeStruct((1, 2), jnp.float32),
        grid=(c,),
        in_specs=[
            pl.BlockSpec((1, GCN_LEVELS, n_pad), lambda i: (i, 0, 0)),
            pl.BlockSpec((c, 3, 3 * GCN_LEVELS), lambda i: (0, 0, 0)),   # resident
            pl.BlockSpec((c, 3, 1), lambda i: (0, 0, 0)),                # resident
            pl.BlockSpec((c, 1, 9), lambda i: (0, 0, 0)),                # resident
            pl.BlockSpec((c, 1, 1), lambda i: (0, 0, 0)),                # resident
            pl.BlockSpec((c, n_pad, 32), lambda i: (0, 0, 0)),           # resident
            pl.BlockSpec((1, 32), lambda i: (0, 0)),
            pl.BlockSpec((32, 6), lambda i: (0, 0)),
            pl.BlockSpec((1, 6), lambda i: (0, 0)),
            pl.BlockSpec((6, 2), lambda i: (0, 0)),
            pl.BlockSpec((1, 2), lambda i: (0, 0)),
        ],
        out_specs=pl.BlockSpec((1, 2), lambda i: (0, 0)),
        scratch_shapes=[pltpu.VMEM((1, 32), jnp.float32)],
        compiler_params=pltpu.CompilerParams(dimension_semantics=("arbitrary",)),
    )(xs, c1w, c1b, c2w, c2b, f1w,
      params["fc1_b"], params["fc2_w"], params["fc2_b"],
      params["fc3_w"], params["fc3_b"])
    return out


# --------------------------------------------------------------------------- pure-JAX reference
def reference_forward(x, edge_index, edge_attr, params):
    n = x.shape[0]
    c = edge_attr.shape[1]
    src, dst = edge_index[0], edge_index[1]
    eye = jnp.eye(n, dtype=jnp.float32)
    hp = jax.lax.Precision.HIGHEST
    chans = []
    for ch in range(c):
        a = jnp.zeros((n, n), jnp.float32).at[dst, src].add(edge_attr[:, ch]) + eye
        deg = jnp.sum(a, axis=1)
        dinv = jnp.where(deg > 0, deg ** -0.5, 0.0)
        a_norm = dinv[:, None] * a * dinv[None, :]
        h = jnp.matmul(x, params["gcn_w1"][ch, 0][:, None], precision=hp)
        h = jnp.matmul(a_norm, h, precision=hp) + params["gcn_b"][ch, 0, 0]
        cols = [h]
        for k in range(GCN_LEVELS - 1):
            h = jnp.matmul(a_norm, h * params["gcn_wr"][ch, 0, k], precision=hp) \
                + params["gcn_b"][ch, 0, k + 1]
            cols.append(h)
        xx = jnp.concatenate(cols, axis=1)                 # [N, 5]
        perm = jnp.argsort(-xx[:, -1])                     # global_sort_pool, k = N
        xs = xx[perm].T                                    # [5, N]
        w1, b1 = params["conv1_w"][ch], params["conv1_b"][ch]     # [3,5,3], [3]
        l1 = n - 2
        o1 = b1[:, None] + sum(jnp.matmul(w1[:, :, k], xs[:, k:k + l1], precision=hp)
                               for k in range(3))
        l2 = l1 - 2
        m1 = jnp.max(jnp.stack([o1[:, k:k + l2] for k in range(3)]), axis=0)
        w2, b2 = params["conv2_w"][ch], params["conv2_b"][ch]     # [1,3,3], [1]
        l3 = l2 - 2
        o2 = b2[:, None] + sum(jnp.matmul(w2[:, :, k], m1[:, k:k + l3], precision=hp)
                               for k in range(3))
        l4 = l3 - 2
        m2 = jnp.max(jnp.stack([o2[:, k:k + l4] for k in range(3)]), axis=0)   # [1, N-8]
        chans.append(m2)
    flat = jnp.concatenate(chans, axis=0).reshape(1, -1)
    elu = lambda v: jnp.where(v > 0, v, jnp.exp(jnp.minimum(v, 0.0)) - 1.0)
    h = elu(jnp.matmul(flat, params["fc1_w"], precision=hp) + params["fc1_b"])
    h = elu(jnp.matmul(h, params["fc2_w"], precision=hp) + params["fc2_b"])
    return jnp.matmul(h, params["fc3_w"], precision=hp) + params["fc3_b"]


# --------------------------------------------------------------------------- main
if __name__ == "__main__":
    N, F, C, E = 32, 8, 2, 96          # num_nodes, num_features, edge-attr channels, num_edges
    key = jax.random.PRNGKey(0)
    ks = jax.random.split(key, 20)

    x = jax.random.normal(ks[0], (N, F), jnp.float32)
    src = jax.random.randint(ks[1], (E,), 0, N)
    dst = jax.random.randint(ks[2], (E,), 0, N)
    dst = jnp.where(dst == src, (dst + 1) % N, dst)        # no explicit self loops in the graph
    edge_index = jnp.stack([src, dst], axis=0)
    edge_attr = jax.random.uniform(ks[3], (E, C), jnp.float32, 0.1, 1.0)

    din = C * (N - 8)                                      # analogue of channels * 121
    params = dict(
        gcn_w1=0.5 * jax.random.normal(ks[4], (C, 1, F), jnp.float32),
        gcn_wr=0.5 * jax.random.normal(ks[5], (C, 1, GCN_LEVELS - 1), jnp.float32),
        gcn_b=jnp.zeros((C, 1, GCN_LEVELS), jnp.float32),  # PyG GCNConv bias init = zeros
        conv1_w=0.3 * jax.random.normal(ks[6], (C, 3, GCN_LEVELS, 3), jnp.float32),  # [C,out,in,k]
        conv1_b=0.1 * jax.random.normal(ks[7], (C, 3), jnp.float32),
        conv2_w=0.3 * jax.random.normal(ks[8], (C, 1, 3, 3), jnp.float32),           # [C,out,in,k]
        conv2_b=0.1 * jax.random.normal(ks[9], (C, 1), jnp.float32),
        fc1_w=0.2 * jax.random.normal(ks[10], (din, 32), jnp.float32),
        fc1_b=0.1 * jax.random.normal(ks[11], (1, 32), jnp.float32),
        fc2_w=0.2 * jax.random.normal(ks[12], (32, 6), jnp.float32),
        fc2_b=0.1 * jax.random.normal(ks[13], (1, 6), jnp.float32),
        fc3_w=0.2 * jax.random.normal(ks[14], (6, 2), jnp.float32),
        fc3_b=0.1 * jax.random.normal(ks[15], (1, 2), jnp.float32),
    )

    out = jax.jit(dgcnn2_forward)(x, edge_index, edge_attr, params)
    out = jax.block_until_ready(out)
    assert out.shape == (1, 2)

    ref = reference_forward(x, edge_index, edge_attr, params)
    np.testing.assert_allclose(np.asarray(out), np.asarray(ref), rtol=2e-2, atol=2e-2)

    print("KERNEL_OK")
</pallas_src>

<mosaic_0001>
module attributes {stable_mosaic.version = 11 : i64} {
  func.func @gcn_stack_kernel(%arg0: i32, %arg1: memref<1x128x128xf32, #tpu.memory_space<vmem>>, %arg2: memref<8x128xf32, #tpu.memory_space<vmem>>, %arg3: memref<2x1x8xf32, #tpu.memory_space<vmem>>, %arg4: memref<2x1x4xf32, #tpu.memory_space<vmem>>, %arg5: memref<2x1x5xf32, #tpu.memory_space<vmem>>, %arg6: memref<1x5x128xf32, #tpu.memory_space<vmem>>) attributes {dimension_semantics = [#tpu.dimension_semantics<parallel>], iteration_bounds = array<i64: 2>, scalar_prefetch = 0 : i64, scratch_operands = 0 : i64, tpu.core_type = #tpu.core_type<tc>, window_params = [{transform_indices = @transform_0, window_bounds = array<i64: 1, 128, 128>}, {pipeline_mode = #tpu.pipeline_mode<synchronous>, transform_indices = @transform_1, window_bounds = array<i64: 8, 128>}, {pipeline_mode = #tpu.pipeline_mode<synchronous>, transform_indices = @transform_2, window_bounds = array<i64: 2, 1, 8>}, {pipeline_mode = #tpu.pipeline_mode<synchronous>, transform_indices = @transform_3, window_bounds = array<i64: 2, 1, 4>}, {pipeline_mode = #tpu.pipeline_mode<synchronous>, transform_indices = @transform_4, window_bounds = array<i64: 2, 1, 5>}, {transform_indices = @transform_5, window_bounds = array<i64: 1, 5, 128>}]} {
    %c0 = arith.constant 0 : index
    %c0_0 = arith.constant 0 : index
    %c0_1 = arith.constant 0 : index
    %0 = vector.load %arg1[%c0, %c0_0, %c0_1] : memref<1x128x128xf32, #tpu.memory_space<vmem>>, vector<1x128x128xf32>
    %1 = vector.shape_cast %0 : vector<1x128x128xf32> to vector<128x128xf32>
    %c0_2 = arith.constant 0 : index
    %c0_3 = arith.constant 0 : index
    %2 = vector.load %arg2[%c0_2, %c0_3] : memref<8x128xf32, #tpu.memory_space<vmem>>, vector<8x128xf32>
    %3 = arith.index_cast %arg0 : i32 to index
    %c0_4 = arith.constant 0 : index
    %c0_5 = arith.constant 0 : index
    %4 = vector.load %arg3[%3, %c0_4, %c0_5] : memref<2x1x8xf32, #tpu.memory_space<vmem>>, vector<1x1x8xf32>
    %5 = vector.shape_cast %4 : vector<1x1x8xf32> to vector<1x8xf32>
    %6 = arith.index_cast %arg0 : i32 to index
    %c0_6 = arith.constant 0 : index
    %c0_7 = arith.constant 0 : index
    %7 = vector.load %arg4[%6, %c0_6, %c0_7] : memref<2x1x4xf32, #tpu.memory_space<vmem>>, vector<1x1x4xf32>
    %8 = vector.shape_cast %7 : vector<1x1x4xf32> to vector<1x4xf32>
    %9 = arith.index_cast %arg0 : i32 to index
    %c0_8 = arith.constant 0 : index
    %c0_9 = arith.constant 0 : index
    %10 = vector.load %arg5[%9, %c0_8, %c0_9] : memref<2x1x5xf32, #tpu.memory_space<vmem>>, vector<1x1x5xf32>
    %11 = vector.shape_cast %10 : vector<1x1x5xf32> to vector<1x5xf32>
    %12 = tpu.iota {dimensions = array<i32: 1>} : vector<1x128xi32>
    %c32_i32 = arith.constant 32 : i32
    %13 = vector.broadcast %c32_i32 : i32 to vector<1x128xi32>
    %14 = arith.cmpi slt, %12, %13 : vector<1x128xi32>
    %cst = arith.constant dense<0.000000e+00> : vector<1x128xf32>
    %15 = tpu.matmul %5, %2, %cst {dimension_numbers = #tpu.dot_dimension_numbers<[1], [0], [0], [1], [0, 0, 1, 1], [], []>} : vector<1x8xf32>, vector<8x128xf32>, vector<1x128xf32> -> vector<1x128xf32>
    %cst_10 = arith.constant dense<0.000000e+00> : vector<1x128xf32>
    %16 = tpu.matmul %15, %1, %cst_10 {dimension_numbers = #tpu.dot_dimension_numbers<[1], [0], [0], [1], [0, 0, 1, 1], [], []>} : vector<1x128xf32>, vector<128x128xf32>, vector<1x128xf32> -> vector<1x128xf32>
    %17 = vector.extract_strided_slice %11 {offsets = [0, 0], sizes = [1, 1], strides = [1, 1]} : vector<1x5xf32> to vector<1x1xf32>
    %18 = vector.broadcast %17 : vector<1x1xf32> to vector<1x128xf32>
    %19 = arith.addf %16, %18 : vector<1x128xf32>
    %c0_11 = arith.constant 0 : index
    %c0_12 = arith.constant 0 : index
    %c0_13 = arith.constant 0 : index
    %20 = vector.load %arg6[%c0_11, %c0_12, %c0_13] : memref<1x5x128xf32, #tpu.memory_space<vmem>>, vector<1x1x128xf32>
    %21 = vector.shape_cast %20 : vector<1x1x128xf32> to vector<1x128xf32>
    %22 = vector.shape_cast %19 : vector<1x128xf32> to vector<1x1x128xf32>
    tpu.vector_store %arg6[%c0_11, %c0_12, %c0_13], %22 {strides = array<i32>} : memref<1x5x128xf32, #tpu.memory_space<vmem>>, vector<1x1x128xf32>,
    %23 = vector.extract_strided_slice %8 {offsets = [0, 0], sizes = [1, 1], strides = [1, 1]} : vector<1x4xf32> to vector<1x1xf32>
    %24 = vector.broadcast %23 : vector<1x1xf32> to vector<1x128xf32>
    %25 = arith.mulf %19, %24 : vector<1x128xf32>
    %cst_14 = arith.constant dense<0.000000e+00> : vector<1x128xf32>
    %26 = tpu.matmul %25, %1, %cst_14 {dimension_numbers = #tpu.dot_dimension_numbers<[1], [0], [0], [1], [0, 0, 1, 1], [], []>} : vector<1x128xf32>, vector<128x128xf32>, vector<1x128xf32> -> vector<1x128xf32>
    %27 = vector.extract_strided_slice %11 {offsets = [0, 1], sizes = [1, 1], strides = [1, 1]} : vector<1x5xf32> to vector<1x1xf32>
    %28 = vector.broadcast %27 : vector<1x1xf32> to vector<1x128xf32>
    %29 = arith.addf %26, %28 : vector<1x128xf32>
    %c0_15 = arith.constant 0 : index
    %c1 = arith.constant 1 : index
    %c0_16 = arith.constant 0 : index
    %30 = vector.load %arg6[%c0_15, %c1, %c0_16] : memref<1x5x128xf32, #tpu.memory_space<vmem>>, vector<1x1x128xf32>
    %31 = vector.shape_cast %30 : vector<1x1x128xf32> to vector<1x128xf32>
    %32 = vector.shape_cast %29 : vector<1x128xf32> to vector<1x1x128xf32>
    tpu.vector_store %arg6[%c0_15, %c1, %c0_16], %32 {strides = array<i32>} : memref<1x5x128xf32, #tpu.memory_space<vmem>>, vector<1x1x128xf32>,
    %33 = vector.extract_strided_slice %8 {offsets = [0, 1], sizes = [1, 1], strides = [1, 1]} : vector<1x4xf32> to vector<1x1xf32>
    %34 = vector.broadcast %33 : vector<1x1xf32> to vector<1x128xf32>
    %35 = arith.mulf %29, %34 : vector<1x128xf32>
    %cst_17 = arith.constant dense<0.000000e+00> : vector<1x128xf32>
    %36 = tpu.matmul %35, %1, %cst_17 {dimension_numbers = #tpu.dot_dimension_numbers<[1], [0], [0], [1], [0, 0, 1, 1], [], []>} : vector<1x128xf32>, vector<128x128xf32>, vector<1x128xf32> -> vector<1x128xf32>
    %37 = vector.extract_strided_slice %11 {offsets = [0, 2], sizes = [1, 1], strides = [1, 1]} : vector<1x5xf32> to vector<1x1xf32>
    %38 = vector.broadcast %37 : vector<1x1xf32> to vector<1x128xf32>
    %39 = arith.addf %36, %38 : vector<1x128xf32>
    %c0_18 = arith.constant 0 : index
    %c2 = arith.constant 2 : index
    %c0_19 = arith.constant 0 : index
    %40 = vector.load %arg6[%c0_18, %c2, %c0_19] : memref<1x5x128xf32, #tpu.memory_space<vmem>>, vector<1x1x128xf32>
    %41 = vector.shape_cast %40 : vector<1x1x128xf32> to vector<1x128xf32>
    %42 = vector.shape_cast %39 : vector<1x128xf32> to vector<1x1x128xf32>
    tpu.vector_store %arg6[%c0_18, %c2, %c0_19], %42 {strides = array<i32>} : memref<1x5x128xf32, #tpu.memory_space<vmem>>, vector<1x1x128xf32>,
    %43 = vector.extract_strided_slice %8 {offsets = [0, 2], sizes = [1, 1], strides = [1, 1]} : vector<1x4xf32> to vector<1x1xf32>
    %44 = vector.broadcast %43 : vector<1x1xf32> to vector<1x128xf32>
    %45 = arith.mulf %39, %44 : vector<1x128xf32>
    %cst_20 = arith.constant dense<0.000000e+00> : vector<1x128xf32>
    %46 = tpu.matmul %45, %1, %cst_20 {dimension_numbers = #tpu.dot_dimension_numbers<[1], [0], [0], [1], [0, 0, 1, 1], [], []>} : vector<1x128xf32>, vector<128x128xf32>, vector<1x128xf32> -> vector<1x128xf32>
    %47 = vector.extract_strided_slice %11 {offsets = [0, 3], sizes = [1, 1], strides = [1, 1]} : vector<1x5xf32> to vector<1x1xf32>
    %48 = vector.broadcast %47 : vector<1x1xf32> to vector<1x128xf32>
    %49 = arith.addf %46, %48 : vector<1x128xf32>
    %c0_21 = arith.constant 0 : index
    %c3 = arith.constant 3 : index
    %c0_22 = arith.constant 0 : index
    %50 = vector.load %arg6[%c0_21, %c3, %c0_22] : memref<1x5x128xf32, #tpu.memory_space<vmem>>, vector<1x1x128xf32>
    %51 = vector.shape_cast %50 : vector<1x1x128xf32> to vector<1x128xf32>
    %52 = vector.shape_cast %49 : vector<1x128xf32> to vector<1x1x128xf32>
    tpu.vector_store %arg6[%c0_21, %c3, %c0_22], %52 {strides = array<i32>} : memref<1x5x128xf32, #tpu.memory_space<vmem>>, vector<1x1x128xf32>,
    %53 = vector.extract_strided_slice %8 {offsets = [0, 3], sizes = [1, 1], strides = [1, 1]} : vector<1x4xf32> to vector<1x1xf32>
    %54 = vector.broadcast %53 : vector<1x1xf32> to vector<1x128xf32>
    %55 = arith.mulf %49, %54 : vector<1x128xf32>
    %cst_23 = arith.constant dense<0.000000e+00> : vector<1x128xf32>
    %56 = tpu.matmul %55, %1, %cst_23 {dimension_numbers = #tpu.dot_dimension_numbers<[1], [0], [0], [1], [0, 0, 1, 1], [], []>} : vector<1x128xf32>, vector<128x128xf32>, vector<1x128xf32> -> vector<1x128xf32>
    %57 = vector.extract_strided_slice %11 {offsets = [0, 4], sizes = [1, 1], strides = [1, 1]} : vector<1x5xf32> to vector<1x1xf32>
    %58 = vector.broadcast %57 : vector<1x1xf32> to vector<1x128xf32>
    %59 = arith.addf %56, %58 : vector<1x128xf32>
    %cst_24 = arith.constant 0xFF800000 : f32
    %60 = vector.broadcast %cst_24 : f32 to vector<1x128xf32>
    %61 = arith.select %14, %59, %60 : vector<1x128xi1>, vector<1x128xf32>
    %c0_25 = arith.constant 0 : index
    %c4 = arith.constant 4 : index
    %c0_26 = arith.constant 0 : index
    %62 = vector.load %arg6[%c0_25, %c4, %c0_26] : memref<1x5x128xf32, #tpu.memory_space<vmem>>, vector<1x1x128xf32>
    %63 = vector.shape_cast %62 : vector<1x1x128xf32> to vector<1x128xf32>
    %64 = vector.shape_cast %61 : vector<1x128xf32> to vector<1x1x128xf32>
    tpu.vector_store %arg6[%c0_25, %c4, %c0_26], %64 {strides = array<i32>} : memref<1x5x128xf32, #tpu.memory_space<vmem>>, vector<1x1x128xf32>,
    return
  }
  func.func @transform_0(%arg0: i32) -> (i32, i32, i32) {
    %c0_i32 = arith.constant 0 : i32
    %c0_i32_0 = arith.constant 0 : i32
    %c0_i32_1 = arith.constant 0 : i32
    return %arg0, %c0_i32, %c0_i32_0 : i32, i32, i32
  }
  func.func @transform_1(%arg0: i32) -> (i32, i32) {
    %c0_i32 = arith.constant 0 : i32
    %c0_i32_0 = arith.constant 0 : i32
    %c0_i32_1 = arith.constant 0 : i32
    return %c0_i32, %c0_i32_0 : i32, i32
  }
  func.func @transform_2(%arg0: i32) -> (i32, i32, i32) {
    %c0_i32 = arith.constant 0 : i32
    %c0_i32_0 = arith.constant 0 : i32
    %c0_i32_1 = arith.constant 0 : i32
    %c0_i32_2 = arith.constant 0 : i32
    return %c0_i32, %c0_i32_0, %c0_i32_1 : i32, i32, i32
  }
  func.func @transform_3(%arg0: i32) -> (i32, i32, i32) {
    %c0_i32 = arith.constant 0 : i32
    %c0_i32_0 = arith.constant 0 : i32
    %c0_i32_1 = arith.constant 0 : i32
    %c0_i32_2 = arith.constant 0 : i32
    return %c0_i32, %c0_i32_0, %c0_i32_1 : i32, i32, i32
  }
  func.func @transform_4(%arg0: i32) -> (i32, i32, i32) {
    %c0_i32 = arith.constant 0 : i32
    %c0_i32_0 = arith.constant 0 : i32
    %c0_i32_1 = arith.constant 0 : i32
    %c0_i32_2 = arith.constant 0 : i32
    return %c0_i32, %c0_i32_0, %c0_i32_1 : i32, i32, i32
  }
  func.func @transform_5(%arg0: i32) -> (i32, i32, i32) {
    %c0_i32 = arith.constant 0 : i32
    %c0_i32_0 = arith.constant 0 : i32
    %c0_i32_1 = arith.constant 0 : i32
    return %arg0, %c0_i32, %c0_i32_0 : i32, i32, i32
  }
}

module attributes {stable_mosaic.version = 11 : i64} {
  func.func @conv_mlp_kernel(%arg0: i32, %arg1: memref<1x5x128xf32, #tpu.memory_space<vmem>>, %arg2: memref<2x3x15xf32, #tpu.memory_space<vmem>>, %arg3: memref<2x3x1xf32, #tpu.memory_space<vmem>>, %arg4: memref<2x1x9xf32, #tpu.memory_space<vmem>>, %arg5: memref<2x1x1xf32, #tpu.memory_space<vmem>>, %arg6: memref<2x128x32xf32, #tpu.memory_space<vmem>>, %arg7: memref<1x32xf32, #tpu.memory_space<vmem>>, %arg8: memref<32x6xf32, #tpu.memory_space<vmem>>, %arg9: memref<1x6xf32, #tpu.memory_space<vmem>>, %arg10: memref<6x2xf32, #tpu.memory_space<vmem>>, %arg11: memref<1x2xf32, #tpu.memory_space<vmem>>, %arg12: memref<1x2xf32, #tpu.memory_space<vmem>>, %arg13: memref<1x32xf32, #tpu.memory_space<vmem>>) attributes {dimension_semantics = [#tpu.dimension_semantics<arbitrary>], iteration_bounds = array<i64: 2>, scalar_prefetch = 0 : i64, scratch_operands = 1 : i64, tpu.core_type = #tpu.core_type<tc>, window_params = [{transform_indices = @transform_0, window_bounds = array<i64: 1, 5, 128>}, {pipeline_mode = #tpu.pipeline_mode<synchronous>, transform_indices = @transform_1, window_bounds = array<i64: 2, 3, 15>}, {pipeline_mode = #tpu.pipeline_mode<synchronous>, transform_indices = @transform_2, window_bounds = array<i64: 2, 3, 1>}, {pipeline_mode = #tpu.pipeline_mode<synchronous>, transform_indices = @transform_3, window_bounds = array<i64: 2, 1, 9>}, {pipeline_mode = #tpu.pipeline_mode<synchronous>, transform_indices = @transform_4, window_bounds = array<i64: 2, 1, 1>}, {pipeline_mode = #tpu.pipeline_mode<synchronous>, transform_indices = @transform_5, window_bounds = array<i64: 2, 128, 32>}, {pipeline_mode = #tpu.pipeline_mode<synchronous>, transform_indices = @transform_6, window_bounds = array<i64: 1, 32>}, {pipeline_mode = #tpu.pipeline_mode<synchronous>, transform_indices = @transform_7, window_bounds = array<i64: 32, 6>}, {pipeline_mode = #tpu.pipeline_mode<synchronous>, transform_indices = @transform_8, window_bounds = array<i64: 1, 6>}, {pipeline_mode = #tpu.pipeline_mode<synchronous>, transform_indices = @transform_9, window_bounds = array<i64: 6, 2>}, {pipeline_mode = #tpu.pipeline_mode<synchronous>, transform_indices = @transform_10, window_bounds = array<i64: 1, 2>}, {pipeline_mode = #tpu.pipeline_mode<synchronous>, transform_indices = @transform_11, window_bounds = array<i64: 1, 2>}]} {
    %c0_i32 = arith.constant 0 : i32
    %0 = arith.cmpi eq, %arg0, %c0_i32 : i32
    %1 = arith.extui %0 : i1 to i32
    %c0_i32_0 = arith.constant 0 : i32
    %2 = arith.cmpi ne, %1, %c0_i32_0 : i32
    scf.if %2 {
      %cst_27 = arith.constant 0.000000e+00 : f32
      %52 = vector.broadcast %cst_27 : f32 to vector<1x32xf32>
      %c0_28 = arith.constant 0 : index
      %c0_29 = arith.constant 0 : index
      %53 = vector.load %arg13[%c0_28, %c0_29] : memref<1x32xf32, #tpu.memory_space<vmem>>, vector<1x32xf32>
      tpu.vector_store %arg13[%c0_28, %c0_29], %52 {strides = array<i32>} : memref<1x32xf32, #tpu.memory_space<vmem>>, vector<1x32xf32>,
    } else {
    }
    %c0 = arith.constant 0 : index
    %c0_1 = arith.constant 0 : index
    %c0_2 = arith.constant 0 : index
    %3 = vector.load %arg1[%c0, %c0_1, %c0_2] : memref<1x5x128xf32, #tpu.memory_space<vmem>>, vector<1x5x128xf32>
    %4 = vector.shape_cast %3 : vector<1x5x128xf32> to vector<5x128xf32>
    %5 = arith.index_cast %arg0 : i32 to index
    %c0_3 = arith.constant 0 : index
    %c0_4 = arith.constant 0 : index
    %6 = vector.load %arg2[%5, %c0_3, %c0_4] : memref<2x3x15xf32, #tpu.memory_space<vmem>>, vector<1x3x15xf32>
    %7 = vector.shape_cast %6 : vector<1x3x15xf32> to vector<3x15xf32>
    %8 = arith.index_cast %arg0 : i32 to index
    %c0_5 = arith.constant 0 : index
    %c0_6 = arith.constant 0 : index
    %9 = vector.load %arg3[%8, %c0_5, %c0_6] : memref<2x3x1xf32, #tpu.memory_space<vmem>>, vector<1x3x1xf32>
    %10 = vector.shape_cast %9 : vector<1x3x1xf32> to vector<3x1xf32>
    %c127_i32 = arith.constant 127 : i32
    %11 = tpu.dynamic_rotate %4 by %c127_i32 dim 1 : vector<5x128xf32>, i32 -> vector<5x128xf32>
    %c126_i32 = arith.constant 126 : i32
    %12 = tpu.dynamic_rotate %4 by %c126_i32 dim 1 : vector<5x128xf32>, i32 -> vector<5x128xf32>
    %13 = tpu.concatenate %4, %11, %12 in 0 : vector<5x128xf32>, vector<5x128xf32>, vector<5x128xf32> -> vector<15x128xf32>
    %cst = arith.constant dense<0.000000e+00> : vector<3x128xf32>
    %14 = tpu.matmul %7, %13, %cst {dimension_numbers = #tpu.dot_dimension_numbers<[1], [0], [0], [1], [0, 0, 1, 1], [], []>} : vector<3x15xf32>, vector<15x128xf32>, vector<3x128xf32> -> vector<3x128xf32>
    %15 = vector.broadcast %10 : vector<3x1xf32> to vector<3x128xf32>
    %16 = arith.addf %14, %15 : vector<3x128xf32>
    %c127_i32_7 = arith.constant 127 : i32
    %17 = tpu.dynamic_rotate %16 by %c127_i32_7 dim 1 : vector<3x128xf32>, i32 -> vector<3x128xf32>
    %18 = arith.maximumf %16, %17 : vector<3x128xf32>
    %c126_i32_8 = arith.constant 126 : i32
    %19 = tpu.dynamic_rotate %16 by %c126_i32_8 dim 1 : vector<3x128xf32>, i32 -> vector<3x128xf32>
    %20 = arith.maximumf %18, %19 : vector<3x128xf32>
    %21 = arith.index_cast %arg0 : i32 to index
    %c0_9 = arith.constant 0 : index
    %c0_10 = arith.constant 0 : index
    %22 = vector.load %arg4[%21, %c0_9, %c0_10] : memref<2x1x9xf32, #tpu.memory_space<vmem>>, vector<1x1x9xf32>
    %23 = vector.shape_cast %22 : vector<1x1x9xf32> to vector<1x9xf32>
    %24 = arith.index_cast %arg0 : i32 to index
    %c0_11 = arith.constant 0 : index
    %c0_12 = arith.constant 0 : index
    %25 = vector.load %arg5[%24, %c0_11, %c0_12] : memref<2x1x1xf32, #tpu.memory_space<vmem>>, vector<1x1x1xf32>
    %26 = vector.shape_cast %25 : vector<1x1x1xf32> to vector<1x1xf32>
    %c127_i32_13 = arith.constant 127 : i32
    %27 = tpu.dynamic_rotate %20 by %c127_i32_13 dim 1 : vector<3x128xf32>, i32 -> vector<3x128xf32>
    %c126_i32_14 = arith.constant 126 : i32
    %28 = tpu.dynamic_rotate %20 by %c126_i32_14 dim 1 : vector<3x128xf32>, i32 -> vector<3x128xf32>
    %29 = tpu.concatenate %20, %27, %28 in 0 : vector<3x128xf32>, vector<3x128xf32>, vector<3x128xf32> -> vector<9x128xf32>
    %cst_15 = arith.constant dense<0.000000e+00> : vector<1x128xf32>
    %30 = tpu.matmul %23, %29, %cst_15 {dimension_numbers = #tpu.dot_dimension_numbers<[1], [0], [0], [1], [0, 0, 1, 1], [], []>} : vector<1x9xf32>, vector<9x128xf32>, vector<1x128xf32> -> vector<1x128xf32>
    %31 = vector.broadcast %26 : vector<1x1xf32> to vector<1x128xf32>
    %32 = arith.addf %30, %31 : vector<1x128xf32>
    %c127_i32_16 = arith.constant 127 : i32
    %33 = tpu.dynamic_rotate %32 by %c127_i32_16 dim 1 : vector<1x128xf32>, i32 -> vector<1x128xf32>
    %34 = arith.maximumf %32, %33 : vector<1x128xf32>
    %c126_i32_17 = arith.constant 126 : i32
    %35 = tpu.dynamic_rotate %32 by %c126_i32_17 dim 1 : vector<1x128xf32>, i32 -> vector<1x128xf32>
    %36 = arith.maximumf %34, %35 : vector<1x128xf32>
    %37 = tpu.iota {dimensions = array<i32: 1>} : vector<1x128xi32>
    %c24_i32 = arith.constant 24 : i32
    %38 = vector.broadcast %c24_i32 : i32 to vector<1x128xi32>
    %39 = arith.cmpi slt, %37, %38 : vector<1x128xi32>
    %cst_18 = arith.constant 0.000000e+00 : f32
    %40 = vector.broadcast %cst_18 : f32 to vector<1x128xf32>
    %41 = arith.select %39, %36, %40 : vector<1x128xi1>, vector<1x128xf32>
    %c0_19 = arith.constant 0 : index
    %c0_20 = arith.constant 0 : index
    %42 = vector.load %arg13[%c0_19, %c0_20] : memref<1x32xf32, #tpu.memory_space<vmem>>, vector<1x32xf32>
    %43 = arith.index_cast %arg0 : i32 to index
    %c0_21 = arith.constant 0 : index
    %c0_22 = arith.constant 0 : index
    %44 = vector.load %arg6[%43, %c0_21, %c0_22] : memref<2x128x32xf32, #tpu.memory_space<vmem>>, vector<1x128x32xf32>
    %45 = vector.shape_cast %44 : vector<1x128x32xf32> to vector<128x32xf32>
    %cst_23 = arith.constant dense<0.000000e+00> : vector<1x32xf32>
    %46 = tpu.matmul %41, %45, %cst_23 {dimension_numbers = #tpu.dot_dimension_numbers<[1], [0], [0], [1], [0, 0, 1, 1], [], []>} : vector<1x128xf32>, vector<128x32xf32>, vector<1x32xf32> -> vector<1x32xf32>
    %47 = arith.addf %42, %46 : vector<1x32xf32>
    %c0_24 = arith.constant 0 : index
    %c0_25 = arith.constant 0 : index
    %48 = vector.load %arg13[%c0_24, %c0_25] : memref<1x32xf32, #tpu.memory_space<vmem>>, vector<1x32xf32>
    tpu.vector_store %arg13[%c0_24, %c0_25], %47 {strides = array<i32>} : memref<1x32xf32, #tpu.memory_space<vmem>>, vector<1x32xf32>,
    %c1_i32 = arith.constant 1 : i32
    %49 = arith.cmpi eq, %arg0, %c1_i32 : i32
    %50 = arith.extui %49 : i1 to i32
    %c0_i32_26 = arith.constant 0 : i32
    %51 = arith.cmpi ne, %50, %c0_i32_26 : i32
    scf.if %51 {
      %c0_27 = arith.constant 0 : index
      %c0_28 = arith.constant 0 : index
      %52 = vector.load %arg13[%c0_27, %c0_28] : memref<1x32xf32, #tpu.memory_space<vmem>>, vector<1x32xf32>
      %c0_29 = arith.constant 0 : index
      %c0_30 = arith.constant 0 : index
      %53 = vector.load %arg7[%c0_29, %c0_30] : memref<1x32xf32, #tpu.memory_space<vmem>>, vector<1x32xf32>
      %54 = arith.addf %52, %53 : vector<1x32xf32>
      %cst_31 = arith.constant 0.000000e+00 : f32
      %55 = vector.broadcast %cst_31 : f32 to vector<1x32xf32>
      %56 = arith.cmpf ogt, %54, %55 : vector<1x32xf32>
      %cst_32 = arith.constant 0.000000e+00 : f32
      %57 = vector.broadcast %cst_32 : f32 to vector<1x32xf32>
      %58 = arith.minimumf %54, %57 : vector<1x32xf32>
      %59 = math.exp %58 : vector<1x32xf32>
      %cst_33 = arith.constant 1.000000e+00 : f32
      %60 = vector.broadcast %cst_33 : f32 to vector<1x32xf32>
      %61 = arith.subf %59, %60 : vector<1x32xf32>
      %62 = arith.select %56, %54, %61 : vector<1x32xi1>, vector<1x32xf32>
      %c0_34 = arith.constant 0 : index
      %c0_35 = arith.constant 0 : index
      %63 = vector.load %arg8[%c0_34, %c0_35] : memref<32x6xf32, #tpu.memory_space<vmem>>, vector<32x6xf32>
      %cst_36 = arith.constant dense<0.000000e+00> : vector<1x6xf32>
      %64 = tpu.matmul %62, %63, %cst_36 {dimension_numbers = #tpu.dot_dimension_numbers<[1], [0], [0], [1], [0, 0, 1, 1], [], []>} : vector<1x32xf32>, vector<32x6xf32>, vector<1x6xf32> -> vector<1x6xf32>
      %c0_37 = arith.constant 0 : index
      %c0_38 = arith.constant 0 : index
      %65 = vector.load %arg9[%c0_37, %c0_38] : memref<1x6xf32, #tpu.memory_space<vmem>>, vector<1x6xf32>
      %66 = arith.addf %64, %65 : vector<1x6xf32>
      %cst_39 = arith.constant 0.000000e+00 : f32
      %67 = vector.broadcast %cst_39 : f32 to vector<1x6xf32>
      %68 = arith.cmpf ogt, %66, %67 : vector<1x6xf32>
      %cst_40 = arith.constant 0.000000e+00 : f32
      %69 = vector.broadcast %cst_40 : f32 to vector<1x6xf32>
      %70 = arith.minimumf %66, %69 : vector<1x6xf32>
      %71 = math.exp %70 : vector<1x6xf32>
      %cst_41 = arith.constant 1.000000e+00 : f32
      %72 = vector.broadcast %cst_41 : f32 to vector<1x6xf32>
      %73 = arith.subf %71, %72 : vector<1x6xf32>
      %74 = arith.select %68, %66, %73 : vector<1x6xi1>, vector<1x6xf32>
      %c0_42 = arith.constant 0 : index
      %c0_43 = arith.constant 0 : index
      %75 = vector.load %arg10[%c0_42, %c0_43] : memref<6x2xf32, #tpu.memory_space<vmem>>, vector<6x2xf32>
      %cst_44 = arith.constant dense<0.000000e+00> : vector<1x2xf32>
      %76 = tpu.matmul %74, %75, %cst_44 {dimension_numbers = #tpu.dot_dimension_numbers<[1], [0], [0], [1], [0, 0, 1, 1], [], []>} : vector<1x6xf32>, vector<6x2xf32>, vector<1x2xf32> -> vector<1x2xf32>
      %c0_45 = arith.constant 0 : index
      %c0_46 = arith.constant 0 : index
      %77 = vector.load %arg11[%c0_45, %c0_46] : memref<1x2xf32, #tpu.memory_space<vmem>>, vector<1x2xf32>
      %78 = arith.addf %76, %77 : vector<1x2xf32>
      %c0_47 = arith.constant 0 : index
      %c0_48 = arith.constant 0 : index
      %79 = vector.load %arg12[%c0_47, %c0_48] : memref<1x2xf32, #tpu.memory_space<vmem>>, vector<1x2xf32>
      tpu.vector_store %arg12[%c0_47, %c0_48], %78 {strides = array<i32>} : memref<1x2xf32, #tpu.memory_space<vmem>>, vector<1x2xf32>,
    } else {
    }
    return
  }
  func.func @transform_0(%arg0: i32) -> (i32, i32, i32) {
    %c0_i32 = arith.constant 0 : i32
    %c0_i32_0 = arith.constant 0 : i32
    %c0_i32_1 = arith.constant 0 : i32
    return %arg0, %c0_i32, %c0_i32_0 : i32, i32, i32
  }
  func.func @transform_1(%arg0: i32) -> (i32, i32, i32) {
    %c0_i32 = arith.constant 0 : i32
    %c0_i32_0 = arith.constant 0 : i32
    %c0_i32_1 = arith.constant 0 : i32
    %c0_i32_2 = arith.constant 0 : i32
    return %c0_i32, %c0_i32_0, %c0_i32_1 : i32, i32, i32
  }
  func.func @transform_2(%arg0: i32) -> (i32, i32, i32) {
    %c0_i32 = arith.constant 0 : i32
    %c0_i32_0 = arith.constant 0 : i32
    %c0_i32_1 = arith.constant 0 : i32
    %c0_i32_2 = arith.constant 0 : i32
    return %c0_i32, %c0_i32_0, %c0_i32_1 : i32, i32, i32
  }
  func.func @transform_3(%arg0: i32) -> (i32, i32, i32) {
    %c0_i32 = arith.constant 0 : i32
    %c0_i32_0 = arith.constant 0 : i32
    %c0_i32_1 = arith.constant 0 : i32
    %c0_i32_2 = arith.constant 0 : i32
    return %c0_i32, %c0_i32_0, %c0_i32_1 : i32, i32, i32
  }
  func.func @transform_4(%arg0: i32) -> (i32, i32, i32) {
    %c0_i32 = arith.constant 0 : i32
    %c0_i32_0 = arith.constant 0 : i32
    %c0_i32_1 = arith.constant 0 : i32
    %c0_i32_2 = arith.constant 0 : i32
    return %c0_i32, %c0_i32_0, %c0_i32_1 : i32, i32, i32
  }
  func.func @transform_5(%arg0: i32) -> (i32, i32, i32) {
    %c0_i32 = arith.constant 0 : i32
    %c0_i32_0 = arith.constant 0 : i32
    %c0_i32_1 = arith.constant 0 : i32
    %c0_i32_2 = arith.constant 0 : i32
    return %c0_i32, %c0_i32_0, %c0_i32_1 : i32, i32, i32
  }
  func.func @transform_6(%arg0: i32) -> (i32, i32) {
    %c0_i32 = arith.constant 0 : i32
    %c0_i32_0 = arith.constant 0 : i32
    %c0_i32_1 = arith.constant 0 : i32
    return %c0_i32, %c0_i32_0 : i32, i32
  }
  func.func @transform_7(%arg0: i32) -> (i32, i32) {
    %c0_i32 = arith.constant 0 : i32
    %c0_i32_0 = arith.constant 0 : i32
    %c0_i32_1 = arith.constant 0 : i32
    return %c0_i32, %c0_i32_0 : i32, i32
  }
  func.func @transform_8(%arg0: i32) -> (i32, i32) {
    %c0_i32 = arith.constant 0 : i32
    %c0_i32_0 = arith.constant 0 : i32
    %c0_i32_1 = arith.constant 0 : i32
    return %c0_i32, %c0_i32_0 : i32, i32
  }
  func.func @transform_9(%arg0: i32) -> (i32, i32) {
    %c0_i32 = arith.constant 0 : i32
    %c0_i32_0 = arith.constant 0 : i32
    %c0_i32_1 = arith.constant 0 : i32
    return %c0_i32, %c0_i32_0 : i32, i32
  }
  func.func @transform_10(%arg0: i32) -> (i32, i32) {
    %c0_i32 = arith.constant 0 : i32
    %c0_i32_0 = arith.constant 0 : i32
    %c0_i32_1 = arith.constant 0 : i32
    return %c0_i32, %c0_i32_0 : i32, i32
  }
  func.func @transform_11(%arg0: i32) -> (i32, i32) {
    %c0_i32 = arith.constant 0 : i32
    %c0_i32_0 = arith.constant 0 : i32
    %c0_i32_1 = arith.constant 0 : i32
    return %c0_i32, %c0_i32_0 : i32, i32
  }
}

</mosaic_0001>

<llo_original>
// kernel: dgcnn2_forward.2
$region0: #{dgcnn2_forward.2}
  #allocation0 [shape = 'u32[]', space=smem, size = 0x4, offset = 0x4, fixed_abs, tag = 'smem constant byte address 0x4 - core index']
  #allocation1 [shape = 'u32[144,128]{1,0:T(1,128)}', space=vmem, size = 0x12000, scoped, tag = 'internal scratch']
  %s0 = inlined_call_operand.vmem [shape: f32[2,128,128], index: 0, kind: input, shape index: {}]
  %s1 = inlined_call_operand.vmem [shape: f32[8,128], index: 1, kind: input, shape index: {}]
  %s2 = inlined_call_operand.vmem [shape: f32[2,1,8], index: 2, kind: input, shape index: {}]
  %s3 = inlined_call_operand.vmem [shape: f32[2,1,4], index: 3, kind: input, shape index: {}]
  %s4 = inlined_call_operand.vmem [shape: f32[2,1,5], index: 4, kind: input, shape index: {}]
  %s5 = inlined_call_operand.vmem [shape: f32[2,5,128], index: 5, kind: output, shape index: {}]
  %s6 = sld [smem:[#allocation0]]
  $region53: #{dgcnn2_forward.2} parent=0
    _
  %s8 = ssub.s32 1, %s6
  %s9 = scalar_select 0, %s8, %s6
  loop: start=0, step=1, limit=4
  $region2: #{dgcnn2_forward.2} parent=0 // loop_pre_header
    _
  $region3: #{dgcnn2_forward.2} parent=0 // loop_header
    %s11 = sphi 0, %s15
    %p12 = scmp.ge.s32.totalorder %s11, 4
    %s21 = sphi 0, %s23
    %s24 = sphi 0, %s21
    %s25 = sphi 0, %s24
    %s41 = sphi 0, %s25
    %s45 = sphi 0, %s45
    %s47 = sphi 0, %s45
    %s48 = sphi 0, %s47
    %s62 = sphi 0, %s48
    %s66 = sphi 0, %s66
    %s68 = sphi 0, %s66
    %s69 = sphi 0, %s68
    %s83 = sphi 0, %s69
    %s87 = sphi 0, %s87
    %s89 = sphi 0, %s87
    %s90 = sphi 0, %s89
    %s104 = sphi 0, %s90
    %s108 = sphi 0, %s108
    %s110 = sphi 0, %s108
    %s111 = sphi 0, %s110
    %s125 = sphi 0, %s111
    %s131 = sphi 0, %s133
    %s134 = sphi 0, %s131
    %s135 = sphi 0, %s134
    %s151 = sphi 0, %s135
  $region4: #{dgcnn2_forward.2} parent=0 // loop_header_branch
    %14 = sbr.rel (%p12) target = $region8
  $region5: #{dgcnn2_forward.2} parent=0 // loop_body
    %s16 = ssub.s32 %s11, 1
    %s17 = ssub.s32 %s11, 2
    %s18 = sadd.s32 %s11, 1
    %s19 = ssub.s32 %s11, %s18
    %p20 = scmp.eq.s32.totalorder %s19, 0
    %s22 = sadd.s32 %s21, 1
    %s23 = scalar_select %p20, %s21, %s22
    %p26 = pneg %p20
    %p27 = scmp.eq.s32.totalorder %s11, 1
    %p28 = por %p26, %p27
    %p29 = scmp.ne.s32.totalorder %s21, %s24
    %p30 = scmp.eq.s32.totalorder %s11, 0
    %p31 = por %p29, %p30
    %p32 = scmp.ne.s32.totalorder %s21, %s24
    %p33 = scmp.eq.s32.totalorder %s16, 1
    %p34 = por %p32, %p33
    %p35 = scmp.ne.s32.totalorder %s24, %s25
    %p36 = scmp.eq.s32.totalorder %s16, 0
    %p37 = por %p35, %p36
    %p38 = scmp.ne.s32.totalorder %s24, %s25
    %p39 = scmp.eq.s32.totalorder %s17, 1
    %p40 = por %p38, %p39
    %p42 = scmp.ne.s32.totalorder %s25, %s41
    %p43 = scmp.eq.s32.totalorder %s17, 0
    %p44 = por %p42, %p43
    %s46 = sadd.s32 %s45, 1
    %p49 = scmp.eq.s32.totalorder %s11, 1
    %p50 = scmp.ne.s32.totalorder %s45, %s47
    %p51 = scmp.eq.s32.totalorder %s11, 0
    %p52 = por %p50, %p51
    %p53 = scmp.ne.s32.totalorder %s45, %s47
    %p54 = scmp.eq.s32.totalorder %s16, 1
    %p55 = por %p53, %p54
    %p56 = scmp.ne.s32.totalorder %s47, %s48
    %p57 = scmp.eq.s32.totalorder %s16, 0
    %p58 = por %p56, %p57
    %p59 = scmp.ne.s32.totalorder %s47, %s48
    %p60 = scmp.eq.s32.totalorder %s17, 1
    %p61 = por %p59, %p60
    %p63 = scmp.ne.s32.totalorder %s48, %s62
    %p64 = scmp.eq.s32.totalorder %s17, 0
    %p65 = por %p63, %p64
    %s67 = sadd.s32 %s66, 1
    %p70 = scmp.eq.s32.totalorder %s11, 1
    %p71 = scmp.ne.s32.totalorder %s66, %s68
    %p72 = scmp.eq.s32.totalorder %s11, 0
    %p73 = por %p71, %p72
    %p74 = scmp.ne.s32.totalorder %s66, %s68
    %p75 = scmp.eq.s32.totalorder %s16, 1
    %p76 = por %p74, %p75
    %p77 = scmp.ne.s32.totalorder %s68, %s69
    %p78 = scmp.eq.s32.totalorder %s16, 0
    %p79 = por %p77, %p78
    %p80 = scmp.ne.s32.totalorder %s68, %s69
    %p81 = scmp.eq.s32.totalorder %s17, 1
    %p82 = por %p80, %p81
    %p84 = scmp.ne.s32.totalorder %s69, %s83
    %p85 = scmp.eq.s32.totalorder %s17, 0
    %p86 = por %p84, %p85
    %s88 = sadd.s32 %s87, 1
    %p91 = scmp.eq.s32.totalorder %s11, 1
    %p92 = scmp.ne.s32.totalorder %s87, %s89
    %p93 = scmp.eq.s32.totalorder %s11, 0
    %p94 = por %p92, %p93
    %p95 = scmp.ne.s32.totalorder %s87, %s89
    %p96 = scmp.eq.s32.totalorder %s16, 1
    %p97 = por %p95, %p96
    %p98 = scmp.ne.s32.totalorder %s89, %s90
    %p99 = scmp.eq.s32.totalorder %s16, 0
    %p100 = por %p98, %p99
    %p101 = scmp.ne.s32.totalorder %s89, %s90
    %p102 = scmp.eq.s32.totalorder %s17, 1
    %p103 = por %p101, %p102
    %p105 = scmp.ne.s32.totalorder %s90, %s104
    %p106 = scmp.eq.s32.totalorder %s17, 0
    %p107 = por %p105, %p106
    %s109 = sadd.s32 %s108, 1
    %p112 = scmp.eq.s32.totalorder %s11, 1
    %p113 = scmp.ne.s32.totalorder %s108, %s110
    %p114 = scmp.eq.s32.totalorder %s11, 0
    %p115 = por %p113, %p114
    %p116 = scmp.ne.s32.totalorder %s108, %s110
    %p117 = scmp.eq.s32.totalorder %s16, 1
    %p118 = por %p116, %p117
    %p119 = scmp.ne.s32.totalorder %s110, %s111
    %p120 = scmp.eq.s32.totalorder %s16, 0
    %p121 = por %p119, %p120
    %p122 = scmp.ne.s32.totalorder %s110, %s111
    %p123 = scmp.eq.s32.totalorder %s17, 1
    %p124 = por %p122, %p123
    %p126 = scmp.ne.s32.totalorder %s111, %s125
    %p127 = scmp.eq.s32.totalorder %s17, 0
    %p128 = por %p126, %p127
    %s129 = ssub.s32 %s11, %s18
    %p130 = scmp.eq.s32.totalorder %s129, 0
    %s132 = sadd.s32 %s131, 1
    %s133 = scalar_select %p130, %s131, %s132
    %p136 = pneg %p130
    %p137 = scmp.eq.s32.totalorder %s11, 1
    %p138 = por %p136, %p137
    %p139 = scmp.ne.s32.totalorder %s131, %s134
    %p140 = scmp.eq.s32.totalorder %s11, 0
    %p141 = por %p139, %p140
    %p142 = scmp.ne.s32.totalorder %s131, %s134
    %p143 = scmp.eq.s32.totalorder %s16, 1
    %p144 = por %p142, %p143
    %p145 = scmp.ne.s32.totalorder %s134, %s135
    %p146 = scmp.eq.s32.totalorder %s16, 0
    %p147 = por %p145, %p146
    %p148 = scmp.ne.s32.totalorder %s134, %s135
    %p149 = scmp.eq.s32.totalorder %s17, 1
    %p150 = por %p148, %p149
    %p152 = scmp.ne.s32.totalorder %s135, %s151
    %p153 = scmp.eq.s32.totalorder %s17, 0
    %p154 = por %p152, %p153
    %p155 = scmp.le.s32.totalorder 1, %s11
    %p156 = scmp.lt.s32.totalorder %s11, 3
    %p157 = pnand %p155, %p156
    %p158 = pneg %p157
    // Predicated region
    $region9: #{dgcnn2_forward.2} parent=5 // pred_check
      _
    $region10: #{dgcnn2_forward.2} parent=5 // pred_check_branch
      %160 = sbr.rel (%p157) target = $region12
    $region11: #{dgcnn2_forward.2} parent=5 // pred_region
      %s161 = ssub.s32 %s11, 1
      // Predicated region
      $region13: #{dgcnn2_forward.2} parent=11 // pred_check
        %p162 = pneg %p58
      $region14: #{dgcnn2_forward.2} parent=11 // pred_check_branch
        %164 = sbr.rel (%p162) target = $region16
      $region15: #{dgcnn2_forward.2} parent=11 // pred_region
        _
      $region16: #{dgcnn2_forward.2} parent=11 // pred_fallthru
        _
      // Predicated region
      $region17: #{dgcnn2_forward.2} parent=11 // pred_check
        %p165 = pneg %p79
      $region18: #{dgcnn2_forward.2} parent=11 // pred_check_branch
        %167 = sbr.rel (%p165) target = $region20
      $region19: #{dgcnn2_forward.2} parent=11 // pred_region
        _
      $region20: #{dgcnn2_forward.2} parent=11 // pred_fallthru
        _
      // Predicated region
      $region21: #{dgcnn2_forward.2} parent=11 // pred_check
        %p168 = pneg %p100
      $region22: #{dgcnn2_forward.2} parent=11 // pred_check_branch
        %170 = sbr.rel (%p168) target = $region24
      $region23: #{dgcnn2_forward.2} parent=11 // pred_region
        _
      $region24: #{dgcnn2_forward.2} parent=11 // pred_fallthru
        _
      // Predicated region
      $region25: #{dgcnn2_forward.2} parent=11 // pred_check
        %p171 = pneg %p121
      $region26: #{dgcnn2_forward.2} parent=11 // pred_check_branch
        %173 = sbr.rel (%p171) target = $region28
      $region27: #{dgcnn2_forward.2} parent=11 // pred_region
        _
      $region28: #{dgcnn2_forward.2} parent=11 // pred_fallthru
        _
    $region12: #{dgcnn2_forward.2} parent=5 // pred_fallthru
      _
    %p174 = scmp.lt.s32.totalorder %s11, 2
    // Predicated region
    $region29: #{dgcnn2_forward.2} parent=5 // pred_check
      %p175 = pneg %p174
    $region30: #{dgcnn2_forward.2} parent=5 // pred_check_branch
      %177 = sbr.rel (%p175) target = $region32
    $region31: #{dgcnn2_forward.2} parent=5 // pred_region
      // Predicated region
      $region33: #{dgcnn2_forward.2} parent=31 // pred_check
        %p178 = pneg %p31
      $region34: #{dgcnn2_forward.2} parent=31 // pred_check_branch
        %180 = sbr.rel (%p178) target = $region36
      $region35: #{dgcnn2_forward.2} parent=31 // pred_region
        %p181 = scmp.lt.s32.totalorder %s11, 1
        %s182 = scalar_select %p181, %s11, 1
        %s183 = smul.addr %s182, 16
        %s184 = smul.addr %s183, 8
        %s185 = scalar_lea.vmem %s0, %s184
      $region36: #{dgcnn2_forward.2} parent=31 // pred_fallthru
        _
    $region32: #{dgcnn2_forward.2} parent=5 // pred_fallthru
      _
    %p186 = scmp.le.s32.totalorder 1, %s11
    %p187 = scmp.lt.s32.totalorder %s11, 3
    %p188 = pnand %p186, %p187
    %p189 = pneg %p188
    // Predicated region
    $region37: #{dgcnn2_forward.2} parent=5 // pred_check
      _
    $region38: #{dgcnn2_forward.2} parent=5 // pred_check_branch
      %191 = sbr.rel (%p188) target = $region40
    $region39: #{dgcnn2_forward.2} parent=5 // pred_region
      %s192 = ssub.s32 %s11, 1
      %p193 = scmp.lt.s32.totalorder %s16, 1
      %s194 = scalar_select %p193, %s16, 1
      %s195 = smul.addr %s194, 16
      %s196 = smul.addr %s195, 8
      %s197 = scalar_lea.vmem %s0, %s196
      %p198 = pneg %p37
      %p199 = pneg %p34
      %p200 = pneg %p58
      %p201 = pneg %p55
      %p202 = pneg %p79
      %p203 = pneg %p76
      %p204 = pneg %p100
      %p205 = pneg %p97
      %p206 = pneg %p121
      %p207 = pneg %p118
      %p208 = pneg %p147
      %p209 = pneg %p144
      %p210 = scmp.lt.s32.totalorder %s16, 1
      %s211 = scalar_select %p210, %s16, 1
      %s212 = smul.addr %s211, 8
      %s213 = scalar_lea.vmem %s5, %s212
      %p214 = scmp.lt.s32.totalorder %s16, 1
      %s215 = scalar_select %p214, %s16, 1
      %s216 = smul.addr %s215, 16
      %s217 = smul.addr %s216, 8
      %s218 = scalar_lea.vmem %s0, %s217
      %p219 = scmp.lt.s32.totalorder %s16, 1
      %s220 = scalar_select %p219, %s16, 1
      %s221 = smul.addr %s220, 8
      %s222 = scalar_lea.vmem %s5, %s221
      %v223 = vld [vmem:[%s218] sm:$0xff]
      %v224 = vld [vmem:[%s218 + $0x8] sm:$0xff]
      %v225 = vld [vmem:[%s218 + $0x10] sm:$0xff]
      %v226 = vld [vmem:[%s218 + $0x18] sm:$0xff]
      %v227 = vld [vmem:[%s218 + $0x20] sm:$0xff]
      %v228 = vld [vmem:[%s218 + $0x28] sm:$0xff]
      %v229 = vld [vmem:[%s218 + $0x30] sm:$0xff]
      %v230 = vld [vmem:[%s218 + $0x38] sm:$0xff]
      %v231 = vld [vmem:[%s218 + $0x40] sm:$0xff]
      %v232 = vld [vmem:[%s218 + $0x48] sm:$0xff]
      %v233 = vld [vmem:[%s218 + $0x50] sm:$0xff]
      %v234 = vld [vmem:[%s218 + $0x58] sm:$0xff]
      %v235 = vld [vmem:[%s218 + $0x60] sm:$0xff]
      %v236 = vld [vmem:[%s218 + $0x68] sm:$0xff]
      %v237 = vld [vmem:[%s218 + $0x70] sm:$0xff]
      %v238 = vld [vmem:[%s218 + $0x78] sm:$0xff]
      %v239 = vld [vmem:[%s1] sm:$0xff]
      %s240 = scalar_lea.vmem %s2, %s16
      %v241 = vld [vmem:[%s240] sm:$0x1]
      %s242 = scalar_lea.vmem %s3, %s16
      %v243 = vld [vmem:[%s242] sm:$0x1]
      %s244 = scalar_lea.vmem %s4, %s16
      %v245 = vld [vmem:[%s244] sm:$0x1]
      %v246 = vlaneseq
      %v247 = vand.u32 %v246, 127
      %vm248 = vcmp.lt.s32.totalorder %v247, 32
      %vm249 = vcmask 64512
      %v251 = vsel %vm249, %v241, 0
      %253 = vmatprep.subr.mxu0 0.0
      %254 = vmatpush1.msra.mxu0 %v239
      %255 = vmatprep.subr.mxu0 0.0
      %256 = vmatpush1.msra.mxu0 0.0
      %257 = vmatprep.subr.mxu0 0.0
      %258 = vmatpush1.msra.mxu0 0.0
      %259 = vmatprep.subr.mxu0 0.0
      %260 = vmatpush1.msra.mxu0 0.0
      %261 = vmatprep.subr.mxu0 0.0
      %262 = vmatpush1.msra.mxu0 0.0
      %263 = vmatprep.subr.mxu0 0.0
      %264 = vmatpush1.msra.mxu0 0.0
      %265 = vmatprep.subr.mxu0 0.0
      %266 = vmatpush1.msra.mxu0 0.0
      %267 = vmatprep.subr.mxu0 0.0
      %268 = vmatpush1.msra.mxu0 0.0
      %269 = vmatprep.subr.mxu0 0.0
      %270 = vmatpush1.msra.mxu0 0.0
      %271 = vmatprep.subr.mxu0 0.0
      %272 = vmatpush1.msra.mxu0 0.0
      %273 = vmatprep.subr.mxu0 0.0
      %274 = vmatpush1.msra.mxu0 0.0
      %275 = vmatprep.subr.mxu0 0.0
      %276 = vmatpush1.msra.mxu0 0.0
      %277 = vmatprep.subr.mxu0 0.0
      %278 = vmatpush1.msra.mxu0 0.0
      %279 = vmatprep.subr.mxu0 0.0
      %280 = vmatpush1.msra.mxu0 0.0
      %281 = vmatprep.subr.mxu0 0.0
      %282 = vmatpush1.msra.mxu0 0.0
      %283 = vmatprep.subr.mxu0 0.0
      %284 = vmatpush1.msra.mxu0 0.0
      %285 = vmatprep.subr.mxu0 0.0
      %286 = vmatpush1.msra.mxu0 0.0
      %287 = vmatprep.subr.mxu0 0.0
      %288 = vmatpush1.msra.mxu0 0.0
      %289 = vmatprep.subr.mxu0 0.0
      %290 = vmatpush1.msra.mxu0 0.0
      %291 = vmatprep.subr.mxu0 0.0
      %292 = vmatpush1.msra.mxu0 0.0
      %293 = vmatprep.subr.mxu0 0.0
      %294 = vmatpush1.msra.mxu0 0.0
      %295 = vmatprep.subr.mxu0 0.0
      %296 = vmatpush1.msra.mxu0 0.0
      %297 = vmatprep.subr.mxu0 0.0
      %298 = vmatpush1.msra.mxu0 0.0
      %299 = vmatprep.subr.mxu0 0.0
      %300 = vmatpush1.msra.mxu0 0.0
      %301 = vmatprep.subr.mxu0 0.0
      %302 = vmatpush1.msra.mxu0 0.0
      %303 = vmatprep.subr.mxu0 0.0
      %304 = vmatpush1.msra.mxu0 0.0
      %305 = vmatprep.subr.mxu0 0.0
      %306 = vmatpush1.msra.mxu0 0.0
      %307 = vmatprep.subr.mxu0 0.0
      %308 = vmatpush1.msra.mxu0 0.0
      %309 = vmatprep.subr.mxu0 0.0
      %310 = vmatpush1.msra.mxu0 0.0
      %311 = vmatprep.subr.mxu0 0.0
      %312 = vmatpush1.msra.mxu0 0.0
      %313 = vmatprep.subr.mxu0 0.0
      %314 = vmatpush1.msra.mxu0 0.0
      %315 = vmatprep.subr.mxu0 0.0
      %316 = vmatpush1.msra.mxu0 0.0
      %317 = vmatprep.mubr.f32.mxu0 0.0
      %318 = vmatmul.mubr.f32.gmra.mrb[0].mxu0 %v251
      %v319 = vpop.f32.mrb[0].mxu0
      %v320 = vadd.f32 0.0, %v319
      %v321 = vpop.f32.mrb[0].mxu0
      %322 = vdwg.mxu0
      %324 = vset.pattern.permute.xlu0 0
      %325 = vperm.xlu0 %324, %v245
      %v326 = vpop.permute.xlu0 %325
      %v328 = vlaneseq
      %v329 = vshrl.u32 %v328, 7
      %v330 = vsub.s32 0, %v329
      %v331 = vrot.slane %v326, %v330
      %332 = vmatprep.subr.mxu0 0.0
      %333 = vmatpush1.msra.mxu0 %v223
      %334 = vmatprep.subr.mxu0 0.0
      %335 = vmatpush1.msra.mxu0 %v224
      %336 = vmatprep.subr.mxu0 0.0
      %337 = vmatpush1.msra.mxu0 %v225
      %338 = vmatprep.subr.mxu0 0.0
      %339 = vmatpush1.msra.mxu0 %v226
      %340 = vmatprep.subr.mxu0 0.0
      %341 = vmatpush1.msra.mxu0 %v227
      %342 = vmatprep.subr.mxu0 0.0
      %343 = vmatpush1.msra.mxu0 %v228
      %344 = vmatprep.subr.mxu0 0.0
      %345 = vmatpush1.msra.mxu0 %v229
      %346 = vmatprep.subr.mxu0 0.0
      %347 = vmatpush1.msra.mxu0 %v230
      %348 = vmatprep.subr.mxu0 0.0
      %349 = vmatpush1.msra.mxu0 %v231
      %350 = vmatprep.subr.mxu0 0.0
      %351 = vmatpush1.msra.mxu0 %v232
      %352 = vmatprep.subr.mxu0 0.0
      %353 = vmatpush1.msra.mxu0 %v233
      %354 = vmatprep.subr.mxu0 0.0
      %355 = vmatpush1.msra.mxu0 %v234
      %356 = vmatprep.subr.mxu0 0.0
      %357 = vmatpush1.msra.mxu0 %v235
      %358 = vmatprep.subr.mxu0 0.0
      %359 = vmatpush1.msra.mxu0 %v236
      %360 = vmatprep.subr.mxu0 0.0
      %361 = vmatpush1.msra.mxu0 %v237
      %362 = vmatprep.subr.mxu0 0.0
      %363 = vmatpush1.msra.mxu0 %v238
      %364 = vmatprep.subr.mxu0 0.0
      %365 = vmatpush1.msra.mxu0 0.0
      %366 = vmatprep.subr.mxu0 0.0
      %367 = vmatpush1.msra.mxu0 0.0
      %368 = vmatprep.subr.mxu0 0.0
      %369 = vmatpush1.msra.mxu0 0.0
      %370 = vmatprep.subr.mxu0 0.0
      %371 = vmatpush1.msra.mxu0 0.0
      %372 = vmatprep.subr.mxu0 0.0
      %373 = vmatpush1.msra.mxu0 0.0
      %374 = vmatprep.subr.mxu0 0.0
      %375 = vmatpush1.msra.mxu0 0.0
      %376 = vmatprep.subr.mxu0 0.0
      %377 = vmatpush1.msra.mxu0 0.0
      %378 = vmatprep.subr.mxu0 0.0
      %379 = vmatpush1.msra.mxu0 0.0
      %380 = vmatprep.subr.mxu0 0.0
      %381 = vmatpush1.msra.mxu0 0.0
      %382 = vmatprep.subr.mxu0 0.0
      %383 = vmatpush1.msra.mxu0 0.0
      %384 = vmatprep.subr.mxu0 0.0
      %385 = vmatpush1.msra.mxu0 0.0
      %386 = vmatprep.subr.mxu0 0.0
      %387 = vmatpush1.msra.mxu0 0.0
      %388 = vmatprep.subr.mxu0 0.0
      %389 = vmatpush1.msra.mxu0 0.0
      %390 = vmatprep.subr.mxu0 0.0
      %391 = vmatpush1.msra.mxu0 0.0
      %392 = vmatprep.subr.mxu0 0.0
      %393 = vmatpush1.msra.mxu0 0.0
      %394 = vmatprep.subr.mxu0 0.0
      %395 = vmatpush1.msra.mxu0 0.0
      %396 = vmatprep.mubr.f32.mxu0 0.0
      %397 = vmatmul.mubr.f32.gmra.mrb[0].mxu0 %v320
      %v398 = vpop.f32.mrb[0].mxu0
      %v399 = vadd.f32 %v331, %v398
      %v400 = vpop.f32.mrb[0].mxu0
      %401 = vdwg.mxu0
      %402 = vst [vmem:[%s222] sm:$0x1] %v399
      %404 = vset.pattern.permute.xlu0 0
      %405 = vperm.xlu0 %404, %v243
      %v406 = vpop.permute.xlu0 %405
      %v408 = vlaneseq
      %v409 = vshrl.u32 %v408, 7
      %v410 = vsub.s32 0, %v409
      %v411 = vrot.slane %v406, %v410
      %v412 = vmul.f32 %v399, %v411
      %413 = vset.pattern.permute.xlu0 1
      %414 = vperm.xlu0 %413, %v245
      %v415 = vpop.permute.xlu0 %414
      %v417 = vlaneseq
      %v418 = vshrl.u32 %v417, 7
      %v419 = vsub.s32 0, %v418
      %v420 = vrot.slane %v415, %v419
      %421 = vmatprep.subr.mxu0 0.0
      %422 = vmatpush1.msra.mxu0 %v223
      %423 = vmatprep.subr.mxu0 0.0
      %424 = vmatpush1.msra.mxu0 %v224
      %425 = vmatprep.subr.mxu0 0.0
      %426 = vmatpush1.msra.mxu0 %v225
      %427 = vmatprep.subr.mxu0 0.0
      %428 = vmatpush1.msra.mxu0 %v226
      %429 = vmatprep.subr.mxu0 0.0
      %430 = vmatpush1.msra.mxu0 %v227
      %431 = vmatprep.subr.mxu0 0.0
      %432 = vmatpush1.msra.mxu0 %v228
      %433 = vmatprep.subr.mxu0 0.0
      %434 = vmatpush1.msra.mxu0 %v229
      %435 = vmatprep.subr.mxu0 0.0
      %436 = vmatpush1.msra.mxu0 %v230
      %437 = vmatprep.subr.mxu0 0.0
      %438 = vmatpush1.msra.mxu0 %v231
      %439 = vmatprep.subr.mxu0 0.0
      %440 = vmatpush1.msra.mxu0 %v232
      %441 = vmatprep.subr.mxu0 0.0
      %442 = vmatpush1.msra.mxu0 %v233
      %443 = vmatprep.subr.mxu0 0.0
      %444 = vmatpush1.msra.mxu0 %v234
      %445 = vmatprep.subr.mxu0 0.0
      %446 = vmatpush1.msra.mxu0 %v235
      %447 = vmatprep.subr.mxu0 0.0
      %448 = vmatpush1.msra.mxu0 %v236
      %449 = vmatprep.subr.mxu0 0.0
      %450 = vmatpush1.msra.mxu0 %v237
      %451 = vmatprep.subr.mxu0 0.0
      %452 = vmatpush1.msra.mxu0 %v238
      %453 = vmatprep.subr.mxu0 0.0
      %454 = vmatpush1.msra.mxu0 0.0
      %455 = vmatprep.subr.mxu0 0.0
      %456 = vmatpush1.msra.mxu0 0.0
      %457 = vmatprep.subr.mxu0 0.0
      %458 = vmatpush1.msra.mxu0 0.0
      %459 = vmatprep.subr.mxu0 0.0
      %460 = vmatpush1.msra.mxu0 0.0
      %461 = vmatprep.subr.mxu0 0.0
      %462 = vmatpush1.msra.mxu0 0.0
      %463 = vmatprep.subr.mxu0 0.0
      %464 = vmatpush1.msra.mxu0 0.0
      %465 = vmatprep.subr.mxu0 0.0
      %466 = vmatpush1.msra.mxu0 0.0
      %467 = vmatprep.subr.mxu0 0.0
      %468 = vmatpush1.msra.mxu0 0.0
      %469 = vmatprep.subr.mxu0 0.0
      %470 = vmatpush1.msra.mxu0 0.0
      %471 = vmatprep.subr.mxu0 0.0
      %472 = vmatpush1.msra.mxu0 0.0
      %473 = vmatprep.subr.mxu0 0.0
      %474 = vmatpush1.msra.mxu0 0.0
      %475 = vmatprep.subr.mxu0 0.0
      %476 = vmatpush1.msra.mxu0 0.0
      %477 = vmatprep.subr.mxu0 0.0
      %478 = vmatpush1.msra.mxu0 0.0
      %479 = vmatprep.subr.mxu0 0.0
      %480 = vmatpush1.msra.mxu0 0.0
      %481 = vmatprep.subr.mxu0 0.0
      %482 = vmatpush1.msra.mxu0 0.0
      %483 = vmatprep.subr.mxu0 0.0
      %484 = vmatpush1.msra.mxu0 0.0
      %485 = vmatprep.mubr.f32.mxu0 0.0
      %486 = vmatmul.mubr.f32.gmra.mrb[0].mxu0 %v412
      %v487 = vpop.f32.mrb[0].mxu0
      %v488 = vadd.f32 %v420, %v487
      %v489 = vpop.f32.mrb[0].mxu0
      %490 = vdwg.mxu0
      %491 = vst [vmem:[%s222 + $0x1] sm:$0x1] %v488
      %492 = vset.pattern.permute.xlu0 1
      %493 = vperm.xlu0 %492, %v243
      %v494 = vpop.permute.xlu0 %493
      %v496 = vlaneseq
      %v497 = vshrl.u32 %v496, 7
      %v498 = vsub.s32 0, %v497
      %v499 = vrot.slane %v494, %v498
      %v500 = vmul.f32 %v488, %v499
      %501 = vset.pattern.permute.xlu0 2
      %502 = vperm.xlu0 %501, %v245
      %v503 = vpop.permute.xlu0 %502
      %v505 = vlaneseq
      %v506 = vshrl.u32 %v505, 7
      %v507 = vsub.s32 0, %v506
      %v508 = vrot.slane %v503, %v507
      %509 = vmatprep.subr.mxu0 0.0
      %510 = vmatpush1.msra.mxu0 %v223
      %511 = vmatprep.subr.mxu0 0.0
      %512 = vmatpush1.msra.mxu0 %v224
      %513 = vmatprep.subr.mxu0 0.0
      %514 = vmatpush1.msra.mxu0 %v225
      %515 = vmatprep.subr.mxu0 0.0
      %516 = vmatpush1.msra.mxu0 %v226
      %517 = vmatprep.subr.mxu0 0.0
      %518 = vmatpush1.msra.mxu0 %v227
      %519 = vmatprep.subr.mxu0 0.0
      %520 = vmatpush1.msra.mxu0 %v228
      %521 = vmatprep.subr.mxu0 0.0
      %522 = vmatpush1.msra.mxu0 %v229
      %523 = vmatprep.subr.mxu0 0.0
      %524 = vmatpush1.msra.mxu0 %v230
      %525 = vmatprep.subr.mxu0 0.0
      %526 = vmatpush1.msra.mxu0 %v231
      %527 = vmatprep.subr.mxu0 0.0
      %528 = vmatpush1.msra.mxu0 %v232
      %529 = vmatprep.subr.mxu0 0.0
      %530 = vmatpush1.msra.mxu0 %v233
      %531 = vmatprep.subr.mxu0 0.0
      %532 = vmatpush1.msra.mxu0 %v234
      %533 = vmatprep.subr.mxu0 0.0
      %534 = vmatpush1.msra.mxu0 %v235
      %535 = vmatprep.subr.mxu0 0.0
      %536 = vmatpush1.msra.mxu0 %v236
      %537 = vmatprep.subr.mxu0 0.0
      %538 = vmatpush1.msra.mxu0 %v237
      %539 = vmatprep.subr.mxu0 0.0
      %540 = vmatpush1.msra.mxu0 %v238
      %541 = vmatprep.subr.mxu0 0.0
      %542 = vmatpush1.msra.mxu0 0.0
      %543 = vmatprep.subr.mxu0 0.0
      %544 = vmatpush1.msra.mxu0 0.0
      %545 = vmatprep.subr.mxu0 0.0
      %546 = vmatpush1.msra.mxu0 0.0
      %547 = vmatprep.subr.mxu0 0.0
      %548 = vmatpush1.msra.mxu0 0.0
      %549 = vmatprep.subr.mxu0 0.0
      %550 = vmatpush1.msra.mxu0 0.0
      %551 = vmatprep.subr.mxu0 0.0
      %552 = vmatpush1.msra.mxu0 0.0
      %553 = vmatprep.subr.mxu0 0.0
      %554 = vmatpush1.msra.mxu0 0.0
      %555 = vmatprep.subr.mxu0 0.0
      %556 = vmatpush1.msra.mxu0 0.0
      %557 = vmatprep.subr.mxu0 0.0
      %558 = vmatpush1.msra.mxu0 0.0
      %559 = vmatprep.subr.mxu0 0.0
      %560 = vmatpush1.msra.mxu0 0.0
      %561 = vmatprep.subr.mxu0 0.0
      %562 = vmatpush1.msra.mxu0 0.0
      %563 = vmatprep.subr.mxu0 0.0
      %564 = vmatpush1.msra.mxu0 0.0
      %565 = vmatprep.subr.mxu0 0.0
      %566 = vmatpush1.msra.mxu0 0.0
      %567 = vmatprep.subr.mxu0 0.0
      %568 = vmatpush1.msra.mxu0 0.0
      %569 = vmatprep.subr.mxu0 0.0
      %570 = vmatpush1.msra.mxu0 0.0
      %571 = vmatprep.subr.mxu0 0.0
      %572 = vmatpush1.msra.mxu0 0.0
      %573 = vmatprep.mubr.f32.mxu0 0.0
      %574 = vmatmul.mubr.f32.gmra.mrb[0].mxu0 %v500
      %v575 = vpop.f32.mrb[0].mxu0
      %v576 = vadd.f32 %v508, %v575
      %v577 = vpop.f32.mrb[0].mxu0
      %578 = vdwg.mxu0
      %579 = vst [vmem:[%s222 + $0x2] sm:$0x1] %v576
      %580 = vset.pattern.permute.xlu0 2
      %581 = vperm.xlu0 %580, %v243
      %v582 = vpop.permute.xlu0 %581
      %v584 = vlaneseq
      %v585 = vshrl.u32 %v584, 7
      %v586 = vsub.s32 0, %v585
      %v587 = vrot.slane %v582, %v586
      %v588 = vmul.f32 %v576, %v587
      %589 = vset.pattern.permute.xlu0 3
      %590 = vperm.xlu0 %589, %v245
      %v591 = vpop.permute.xlu0 %590
      %v593 = vlaneseq
      %v594 = vshrl.u32 %v593, 7
      %v595 = vsub.s32 0, %v594
      %v596 = vrot.slane %v591, %v595
      %597 = vmatprep.subr.mxu0 0.0
      %598 = vmatpush1.msra.mxu0 %v223
      %599 = vmatprep.subr.mxu0 0.0
      %600 = vmatpush1.msra.mxu0 %v224
      %601 = vmatprep.subr.mxu0 0.0
      %602 = vmatpush1.msra.mxu0 %v225
      %603 = vmatprep.subr.mxu0 0.0
      %604 = vmatpush1.msra.mxu0 %v226
      %605 = vmatprep.subr.mxu0 0.0
      %606 = vmatpush1.msra.mxu0 %v227
      %607 = vmatprep.subr.mxu0 0.0
      %608 = vmatpush1.msra.mxu0 %v228
      %609 = vmatprep.subr.mxu0 0.0
      %610 = vmatpush1.msra.mxu0 %v229
      %611 = vmatprep.subr.mxu0 0.0
      %612 = vmatpush1.msra.mxu0 %v230
      %613 = vmatprep.subr.mxu0 0.0
      %614 = vmatpush1.msra.mxu0 %v231
      %615 = vmatprep.subr.mxu0 0.0
      %616 = vmatpush1.msra.mxu0 %v232
      %617 = vmatprep.subr.mxu0 0.0
      %618 = vmatpush1.msra.mxu0 %v233
      %619 = vmatprep.subr.mxu0 0.0
      %620 = vmatpush1.msra.mxu0 %v234
      %621 = vmatprep.subr.mxu0 0.0
      %622 = vmatpush1.msra.mxu0 %v235
      %623 = vmatprep.subr.mxu0 0.0
      %624 = vmatpush1.msra.mxu0 %v236
      %625 = vmatprep.subr.mxu0 0.0
      %626 = vmatpush1.msra.mxu0 %v237
      %627 = vmatprep.subr.mxu0 0.0
      %628 = vmatpush1.msra.mxu0 %v238
      %629 = vmatprep.subr.mxu0 0.0
      %630 = vmatpush1.msra.mxu0 0.0
      %631 = vmatprep.subr.mxu0 0.0
      %632 = vmatpush1.msra.mxu0 0.0
      %633 = vmatprep.subr.mxu0 0.0
      %634 = vmatpush1.msra.mxu0 0.0
      %635 = vmatprep.subr.mxu0 0.0
      %636 = vmatpush1.msra.mxu0 0.0
      %637 = vmatprep.subr.mxu0 0.0
      %638 = vmatpush1.msra.mxu0 0.0
      %639 = vmatprep.subr.mxu0 0.0
      %640 = vmatpush1.msra.mxu0 0.0
      %641 = vmatprep.subr.mxu0 0.0
      %642 = vmatpush1.msra.mxu0 0.0
      %643 = vmatprep.subr.mxu0 0.0
      %644 = vmatpush1.msra.mxu0 0.0
      %645 = vmatprep.subr.mxu0 0.0
      %646 = vmatpush1.msra.mxu0 0.0
      %647 = vmatprep.subr.mxu0 0.0
      %648 = vmatpush1.msra.mxu0 0.0
      %649 = vmatprep.subr.mxu0 0.0
      %650 = vmatpush1.msra.mxu0 0.0
      %651 = vmatprep.subr.mxu0 0.0
      %652 = vmatpush1.msra.mxu0 0.0
      %653 = vmatprep.subr.mxu0 0.0
      %654 = vmatpush1.msra.mxu0 0.0
      %655 = vmatprep.subr.mxu0 0.0
      %656 = vmatpush1.msra.mxu0 0.0
      %657 = vmatprep.subr.mxu0 0.0
      %658 = vmatpush1.msra.mxu0 0.0
      %659 = vmatprep.subr.mxu0 0.0
      %660 = vmatpush1.msra.mxu0 0.0
      %661 = vmatprep.mubr.f32.mxu0 0.0
      %662 = vmatmul.mubr.f32.gmra.mrb[0].mxu0 %v588
      %v663 = vpop.f32.mrb[0].mxu0
      %v664 = vadd.f32 %v596, %v663
      %v665 = vpop.f32.mrb[0].mxu0
      %666 = vdwg.mxu0
      %667 = vst [vmem:[%s222 + $0x3] sm:$0x1] %v664
      %668 = vset.pattern.permute.xlu0 3
      %669 = vperm.xlu0 %668, %v243
      %v670 = vpop.permute.xlu0 %669
      %v672 = vlaneseq
      %v673 = vshrl.u32 %v672, 7
      %v674 = vsub.s32 0, %v673
      %v675 = vrot.slane %v670, %v674
      %v676 = vmul.f32 %v664, %v675
      %677 = vset.pattern.permute.xlu0 4
      %678 = vperm.xlu0 %677, %v245
      %v679 = vpop.permute.xlu0 %678
      %v681 = vlaneseq
      %v682 = vshrl.u32 %v681, 7
      %v683 = vsub.s32 0, %v682
      %v684 = vrot.slane %v679, %v683
      %685 = vmatprep.subr.mxu0 0.0
      %686 = vmatpush1.msra.mxu0 %v223
      %687 = vmatprep.subr.mxu0 0.0
      %688 = vmatpush1.msra.mxu0 %v224
      %689 = vmatprep.subr.mxu0 0.0
      %690 = vmatpush1.msra.mxu0 %v225
      %691 = vmatprep.subr.mxu0 0.0
      %692 = vmatpush1.msra.mxu0 %v226
      %693 = vmatprep.subr.mxu0 0.0
      %694 = vmatpush1.msra.mxu0 %v227
      %695 = vmatprep.subr.mxu0 0.0
      %696 = vmatpush1.msra.mxu0 %v228
      %697 = vmatprep.subr.mxu0 0.0
      %698 = vmatpush1.msra.mxu0 %v229
      %699 = vmatprep.subr.mxu0 0.0
      %700 = vmatpush1.msra.mxu0 %v230
      %701 = vmatprep.subr.mxu0 0.0
      %702 = vmatpush1.msra.mxu0 %v231
      %703 = vmatprep.subr.mxu0 0.0
      %704 = vmatpush1.msra.mxu0 %v232
      %705 = vmatprep.subr.mxu0 0.0
      %706 = vmatpush1.msra.mxu0 %v233
      %707 = vmatprep.subr.mxu0 0.0
      %708 = vmatpush1.msra.mxu0 %v234
      %709 = vmatprep.subr.mxu0 0.0
      %710 = vmatpush1.msra.mxu0 %v235
      %711 = vmatprep.subr.mxu0 0.0
      %712 = vmatpush1.msra.mxu0 %v236
      %713 = vmatprep.subr.mxu0 0.0
      %714 = vmatpush1.msra.mxu0 %v237
      %715 = vmatprep.subr.mxu0 0.0
      %716 = vmatpush1.msra.mxu0 %v238
      %717 = vmatprep.subr.mxu0 0.0
      %718 = vmatpush1.msra.mxu0 0.0
      %719 = vmatprep.subr.mxu0 0.0
      %720 = vmatpush1.msra.mxu0 0.0
      %721 = vmatprep.subr.mxu0 0.0
      %722 = vmatpush1.msra.mxu0 0.0
      %723 = vmatprep.subr.mxu0 0.0
      %724 = vmatpush1.msra.mxu0 0.0
      %725 = vmatprep.subr.mxu0 0.0
      %726 = vmatpush1.msra.mxu0 0.0
      %727 = vmatprep.subr.mxu0 0.0
      %728 = vmatpush1.msra.mxu0 0.0
      %729 = vmatprep.subr.mxu0 0.0
      %730 = vmatpush1.msra.mxu0 0.0
      %731 = vmatprep.subr.mxu0 0.0
      %732 = vmatpush1.msra.mxu0 0.0
      %733 = vmatprep.subr.mxu0 0.0
      %734 = vmatpush1.msra.mxu0 0.0
      %735 = vmatprep.subr.mxu0 0.0
      %736 = vmatpush1.msra.mxu0 0.0
      %737 = vmatprep.subr.mxu0 0.0
      %738 = vmatpush1.msra.mxu0 0.0
      %739 = vmatprep.subr.mxu0 0.0
      %740 = vmatpush1.msra.mxu0 0.0
      %741 = vmatprep.subr.mxu0 0.0
      %742 = vmatpush1.msra.mxu0 0.0
      %743 = vmatprep.subr.mxu0 0.0
      %744 = vmatpush1.msra.mxu0 0.0
      %745 = vmatprep.subr.mxu0 0.0
      %746 = vmatpush1.msra.mxu0 0.0
      %747 = vmatprep.subr.mxu0 0.0
      %748 = vmatpush1.msra.mxu0 0.0
      %749 = vmatprep.mubr.f32.mxu0 0.0
      %750 = vmatmul.mubr.f32.gmra.mrb[0].mxu0 %v676
      %v751 = vpop.f32.mrb[0].mxu0
      %v752 = vadd.f32 %v684, %v751
      %v753 = vpop.f32.mrb[0].mxu0
      %754 = vdwg.mxu0
      %v755 = vsel %vm248, %v752, -inf
      %756 = vst [vmem:[%s222 + $0x4] sm:$0x1] %v755
      %p757 = scmp.lt.s32.totalorder %s16, 1
      %s758 = scalar_select %p757, %s16, 1
      %s759 = smul.addr %s758, 8
      %s760 = scalar_lea.vmem %s5, %s759
      // Predicated region
      $region41: #{dgcnn2_forward.2} parent=39 // pred_check
        %p761 = pneg %p144
      $region42: #{dgcnn2_forward.2} parent=39 // pred_check_branch
        %763 = sbr.rel (%p761) target = $region44
      $region43: #{dgcnn2_forward.2} parent=39 // pred_region
        _
      $region44: #{dgcnn2_forward.2} parent=39 // pred_fallthru
        _
    $region40: #{dgcnn2_forward.2} parent=5 // pred_fallthru
      _
    %p764 = scmp.le.s32.totalorder 2, %s11
    // Predicated region
    $region45: #{dgcnn2_forward.2} parent=5 // pred_check
      %p765 = pneg %p764
    $region46: #{dgcnn2_forward.2} parent=5 // pred_check_branch
      %767 = sbr.rel (%p765) target = $region48
    $region47: #{dgcnn2_forward.2} parent=5 // pred_region
      %s768 = ssub.s32 %s11, 2
      // Predicated region
      $region49: #{dgcnn2_forward.2} parent=47 // pred_check
        %p769 = pneg %p150
      $region50: #{dgcnn2_forward.2} parent=47 // pred_check_branch
        %771 = sbr.rel (%p769) target = $region52
      $region51: #{dgcnn2_forward.2} parent=47 // pred_region
        %p772 = scmp.lt.s32.totalorder %s17, 1
        %s773 = scalar_select %p772, %s17, 1
        %s774 = smul.addr %s773, 8
        %s775 = scalar_lea.vmem %s5, %s774
      $region52: #{dgcnn2_forward.2} parent=47 // pred_fallthru
        _
    $region48: #{dgcnn2_forward.2} parent=5 // pred_fallthru
      _
  $region6: #{dgcnn2_forward.2} parent=0 // loop_footer
    %s15 = sadd.s32 1, %s11
  $region7: #{dgcnn2_forward.2} parent=0 // loop_footer_branch
    %10 = sbr.rel target = $region3
  $region8: #{dgcnn2_forward.2} parent=0 // loop_exit
    _

// kernel: dgcnn2_forward.3
$region0: #{dgcnn2_forward.3}
  #allocation0 [shape = 'u32[]', space=smem, size = 0x4, offset = 0x4, fixed_abs, tag = 'smem constant byte address 0x4 - core index']
  #allocation1 [shape = 'u32[144,128]{1,0:T(1,128)}', space=vmem, size = 0x12000, scoped, tag = 'internal scratch']
  #allocation2 [shape = 'f32[1,32]{1,0:T(1,128)}', space=vmem, size = 0x200, scoped, tag = 'scratch operand']
  %s0 = inlined_call_operand.vmem [shape: f32[2,5,128], index: 0, kind: input, shape index: {}]
  %s1 = inlined_call_operand.vmem [shape: f32[2,3,15], index: 1, kind: input, shape index: {}]
  %s2 = inlined_call_operand.vmem [shape: f32[2,3,1], index: 2, kind: input, shape index: {}]
  %s3 = inlined_call_operand.vmem [shape: f32[2,1,9], index: 3, kind: input, shape index: {}]
  %s4 = inlined_call_operand.vmem [shape: f32[2,1,1], index: 4, kind: input, shape index: {}]
  %s5 = inlined_call_operand.vmem [shape: f32[2,128,32], index: 5, kind: input, shape index: {}]
  %s6 = inlined_call_operand.vmem [shape: f32[1,32], index: 6, kind: input, shape index: {}]
  %s7 = inlined_call_operand.vmem [shape: f32[32,6], index: 7, kind: input, shape index: {}]
  %s8 = inlined_call_operand.vmem [shape: f32[1,6], index: 8, kind: input, shape index: {}]
  %s9 = inlined_call_operand.vmem [shape: f32[6,2], index: 9, kind: input, shape index: {}]
  %s10 = inlined_call_operand.vmem [shape: f32[1,2], index: 10, kind: input, shape index: {}]
  %s11 = inlined_call_operand.hbm [shape: f32[1,2], index: 11, kind: output, shape index: {}]
  %s12 = sld [smem:[#allocation0]]
  $region85: #{dgcnn2_forward.3} parent=0
    _
  %s14 = ssub.s32 1, %s12
  %s15 = scalar_select 0, %s14, %s12
  $region1: #{dgcnn2_forward.3} parent=0
    #allocation3 [shape = 'u8[512]{0}', space=vmem, size = 0x400, scoped, tag = 'output window, operand 0, single buffered']
    #allocation4 [shape = 's32[2]{0}', space=sflag, size = 0x8, scoped, tag = 'scoped memory for dgcnn2_forward.3']
    %16 = vsyncpa [#allocation4], 0
    loop: start=0, step=1, limit=4
    $region2: #{dgcnn2_forward.3} parent=1 // loop_pre_header
      _
    $region3: #{dgcnn2_forward.3} parent=1 // loop_header
      %s18 = sphi 0, %s22
      %p19 = scmp.ge.s32.totalorder %s18, 4
      %s28 = sphi 0, %s30
      %s31 = sphi 0, %s28
      %s32 = sphi 0, %s31
      %s48 = sphi 0, %s32
      %s52 = sphi 0, %s52
      %s54 = sphi 0, %s52
      %s55 = sphi 0, %s54
      %s69 = sphi 0, %s55
      %s73 = sphi 0, %s73
      %s75 = sphi 0, %s73
      %s76 = sphi 0, %s75
      %s90 = sphi 0, %s76
      %s94 = sphi 0, %s94
      %s96 = sphi 0, %s94
      %s97 = sphi 0, %s96
      %s111 = sphi 0, %s97
      %s115 = sphi 0, %s115
      %s117 = sphi 0, %s115
      %s118 = sphi 0, %s117
      %s132 = sphi 0, %s118
      %s136 = sphi 0, %s136
      %s138 = sphi 0, %s136
      %s139 = sphi 0, %s138
      %s153 = sphi 0, %s139
      %s157 = sphi 0, %s157
      %s159 = sphi 0, %s157
      %s160 = sphi 0, %s159
      %s174 = sphi 0, %s160
      %s178 = sphi 0, %s178
      %s180 = sphi 0, %s178
      %s181 = sphi 0, %s180
      %s195 = sphi 0, %s181
      %s199 = sphi 0, %s199
      %s201 = sphi 0, %s199
      %s202 = sphi 0, %s201
      %s216 = sphi 0, %s202
      %s220 = sphi 0, %s220
      %s222 = sphi 0, %s220
      %s223 = sphi 0, %s222
      %s237 = sphi 0, %s223
      %s241 = sphi 0, %s241
      %s243 = sphi 0, %s241
      %s244 = sphi 0, %s243
      %s258 = sphi 0, %s244
      %s262 = sphi 0, %s262
      %s264 = sphi 0, %s262
      %s265 = sphi 0, %s264
      %s279 = sphi 0, %s265
    $region4: #{dgcnn2_forward.3} parent=1 // loop_header_branch
      %21 = sbr.rel (%p19) target = $region8
    $region5: #{dgcnn2_forward.3} parent=1 // loop_body
      %s23 = ssub.s32 %s18, 1
      %s24 = ssub.s32 %s18, 2
      %s25 = sadd.s32 %s18, 1
      %s26 = ssub.s32 %s18, %s25
      %p27 = scmp.eq.s32.totalorder %s26, 0
      %s29 = sadd.s32 %s28, 1
      %s30 = scalar_select %p27, %s28, %s29
      %p33 = pneg %p27
      %p34 = scmp.eq.s32.totalorder %s18, 1
      %p35 = por %p33, %p34
      %p36 = scmp.ne.s32.totalorder %s28, %s31
      %p37 = scmp.eq.s32.totalorder %s18, 0
      %p38 = por %p36, %p37
      %p39 = scmp.ne.s32.totalorder %s28, %s31
      %p40 = scmp.eq.s32.totalorder %s23, 1
      %p41 = por %p39, %p40
      %p42 = scmp.ne.s32.totalorder %s31, %s32
      %p43 = scmp.eq.s32.totalorder %s23, 0
      %p44 = por %p42, %p43
      %p45 = scmp.ne.s32.totalorder %s31, %s32
      %p46 = scmp.eq.s32.totalorder %s24, 1
      %p47 = por %p45, %p46
      %p49 = scmp.ne.s32.totalorder %s32, %s48
      %p50 = scmp.eq.s32.totalorder %s24, 0
      %p51 = por %p49, %p50
      %s53 = sadd.s32 %s52, 1
      %p56 = scmp.eq.s32.totalorder %s18, 1
      %p57 = scmp.ne.s32.totalorder %s52, %s54
      %p58 = scmp.eq.s32.totalorder %s18, 0
      %p59 = por %p57, %p58
      %p60 = scmp.ne.s32.totalorder %s52, %s54
      %p61 = scmp.eq.s32.totalorder %s23, 1
      %p62 = por %p60, %p61
      %p63 = scmp.ne.s32.totalorder %s54, %s55
      %p64 = scmp.eq.s32.totalorder %s23, 0
      %p65 = por %p63, %p64
      %p66 = scmp.ne.s32.totalorder %s54, %s55
      %p67 = scmp.eq.s32.totalorder %s24, 1
      %p68 = por %p66, %p67
      %p70 = scmp.ne.s32.totalorder %s55, %s69
      %p71 = scmp.eq.s32.totalorder %s24, 0
      %p72 = por %p70, %p71
      %s74 = sadd.s32 %s73, 1
      %p77 = scmp.eq.s32.totalorder %s18, 1
      %p78 = scmp.ne.s32.totalorder %s73, %s75
      %p79 = scmp.eq.s32.totalorder %s18, 0
      %p80 = por %p78, %p79
      %p81 = scmp.ne.s32.totalorder %s73, %s75
      %p82 = scmp.eq.s32.totalorder %s23, 1
      %p83 = por %p81, %p82
      %p84 = scmp.ne.s32.totalorder %s75, %s76
      %p85 = scmp.eq.s32.totalorder %s23, 0
      %p86 = por %p84, %p85
      %p87 = scmp.ne.s32.totalorder %s75, %s76
      %p88 = scmp.eq.s32.totalorder %s24, 1
      %p89 = por %p87, %p88
      %p91 = scmp.ne.s32.totalorder %s76, %s90
      %p92 = scmp.eq.s32.totalorder %s24, 0
      %p93 = por %p91, %p92
      %s95 = sadd.s32 %s94, 1
      %p98 = scmp.eq.s32.totalorder %s18, 1
      %p99 = scmp.ne.s32.totalorder %s94, %s96
      %p100 = scmp.eq.s32.totalorder %s18, 0
      %p101 = por %p99, %p100
      %p102 = scmp.ne.s32.totalorder %s94, %s96
      %p103 = scmp.eq.s32.totalorder %s23, 1
      %p104 = por %p102, %p103
      %p105 = scmp.ne.s32.totalorder %s96, %s97
      %p106 = scmp.eq.s32.totalorder %s23, 0
      %p107 = por %p105, %p106
      %p108 = scmp.ne.s32.totalorder %s96, %s97
      %p109 = scmp.eq.s32.totalorder %s24, 1
      %p110 = por %p108, %p109
      %p112 = scmp.ne.s32.totalorder %s97, %s111
      %p113 = scmp.eq.s32.totalorder %s24, 0
      %p114 = por %p112, %p113
      %s116 = sadd.s32 %s115, 1
      %p119 = scmp.eq.s32.totalorder %s18, 1
      %p120 = scmp.ne.s32.totalorder %s115, %s117
      %p121 = scmp.eq.s32.totalorder %s18, 0
      %p122 = por %p120, %p121
      %p123 = scmp.ne.s32.totalorder %s115, %s117
      %p124 = scmp.eq.s32.totalorder %s23, 1
      %p125 = por %p123, %p124
      %p126 = scmp.ne.s32.totalorder %s117, %s118
      %p127 = scmp.eq.s32.totalorder %s23, 0
      %p128 = por %p126, %p127
      %p129 = scmp.ne.s32.totalorder %s117, %s118
      %p130 = scmp.eq.s32.totalorder %s24, 1
      %p131 = por %p129, %p130
      %p133 = scmp.ne.s32.totalorder %s118, %s132
      %p134 = scmp.eq.s32.totalorder %s24, 0
      %p135 = por %p133, %p134
      %s137 = sadd.s32 %s136, 1
      %p140 = scmp.eq.s32.totalorder %s18, 1
      %p141 = scmp.ne.s32.totalorder %s136, %s138
      %p142 = scmp.eq.s32.totalorder %s18, 0
      %p143 = por %p141, %p142
      %p144 = scmp.ne.s32.totalorder %s136, %s138
      %p145 = scmp.eq.s32.totalorder %s23, 1
      %p146 = por %p144, %p145
      %p147 = scmp.ne.s32.totalorder %s138, %s139
      %p148 = scmp.eq.s32.totalorder %s23, 0
      %p149 = por %p147, %p148
      %p150 = scmp.ne.s32.totalorder %s138, %s139
      %p151 = scmp.eq.s32.totalorder %s24, 1
      %p152 = por %p150, %p151
      %p154 = scmp.ne.s32.totalorder %s139, %s153
      %p155 = scmp.eq.s32.totalorder %s24, 0
      %p156 = por %p154, %p155
      %s158 = sadd.s32 %s157, 1
      %p161 = scmp.eq.s32.totalorder %s18, 1
      %p162 = scmp.ne.s32.totalorder %s157, %s159
      %p163 = scmp.eq.s32.totalorder %s18, 0
      %p164 = por %p162, %p163
      %p165 = scmp.ne.s32.totalorder %s157, %s159
      %p166 = scmp.eq.s32.totalorder %s23, 1
      %p167 = por %p165, %p166
      %p168 = scmp.ne.s32.totalorder %s159, %s160
      %p169 = scmp.eq.s32.totalorder %s23, 0
      %p170 = por %p168, %p169
      %p171 = scmp.ne.s32.totalorder %s159, %s160
      %p172 = scmp.eq.s32.totalorder %s24, 1
      %p173 = por %p171, %p172
      %p175 = scmp.ne.s32.totalorder %s160, %s174
      %p176 = scmp.eq.s32.totalorder %s24, 0
      %p177 = por %p175, %p176
      %s179 = sadd.s32 %s178, 1
      %p182 = scmp.eq.s32.totalorder %s18, 1
      %p183 = scmp.ne.s32.totalorder %s178, %s180
      %p184 = scmp.eq.s32.totalorder %s18, 0
      %p185 = por %p183, %p184
      %p186 = scmp.ne.s32.totalorder %s178, %s180
      %p187 = scmp.eq.s32.totalorder %s23, 1
      %p188 = por %p186, %p187
      %p189 = scmp.ne.s32.totalorder %s180, %s181
      %p190 = scmp.eq.s32.totalorder %s23, 0
      %p191 = por %p189, %p190
      %p192 = scmp.ne.s32.totalorder %s180, %s181
      %p193 = scmp.eq.s32.totalorder %s24, 1
      %p194 = por %p192, %p193
      %p196 = scmp.ne.s32.totalorder %s181, %s195
      %p197 = scmp.eq.s32.totalorder %s24, 0
      %p198 = por %p196, %p197
      %s200 = sadd.s32 %s199, 1
      %p203 = scmp.eq.s32.totalorder %s18, 1
      %p204 = scmp.ne.s32.totalorder %s199, %s201
      %p205 = scmp.eq.s32.totalorder %s18, 0
      %p206 = por %p204, %p205
      %p207 = scmp.ne.s32.totalorder %s199, %s201
      %p208 = scmp.eq.s32.totalorder %s23, 1
      %p209 = por %p207, %p208
      %p210 = scmp.ne.s32.totalorder %s201, %s202
      %p211 = scmp.eq.s32.totalorder %s23, 0
      %p212 = por %p210, %p211
      %p213 = scmp.ne.s32.totalorder %s201, %s202
      %p214 = scmp.eq.s32.totalorder %s24, 1
      %p215 = por %p213, %p214
      %p217 = scmp.ne.s32.totalorder %s202, %s216
      %p218 = scmp.eq.s32.totalorder %s24, 0
      %p219 = por %p217, %p218
      %s221 = sadd.s32 %s220, 1
      %p224 = scmp.eq.s32.totalorder %s18, 1
      %p225 = scmp.ne.s32.totalorder %s220, %s222
      %p226 = scmp.eq.s32.totalorder %s18, 0
      %p227 = por %p225, %p226
      %p228 = scmp.ne.s32.totalorder %s220, %s222
      %p229 = scmp.eq.s32.totalorder %s23, 1
      %p230 = por %p228, %p229
      %p231 = scmp.ne.s32.totalorder %s222, %s223
      %p232 = scmp.eq.s32.totalorder %s23, 0
      %p233 = por %p231, %p232
      %p234 = scmp.ne.s32.totalorder %s222, %s223
      %p235 = scmp.eq.s32.totalorder %s24, 1
      %p236 = por %p234, %p235
      %p238 = scmp.ne.s32.totalorder %s223, %s237
      %p239 = scmp.eq.s32.totalorder %s24, 0
      %p240 = por %p238, %p239
      %s242 = sadd.s32 %s241, 1
      %p245 = scmp.eq.s32.totalorder %s18, 1
      %p246 = scmp.ne.s32.totalorder %s241, %s243
      %p247 = scmp.eq.s32.totalorder %s18, 0
      %p248 = por %p246, %p247
      %p249 = scmp.ne.s32.totalorder %s241, %s243
      %p250 = scmp.eq.s32.totalorder %s23, 1
      %p251 = por %p249, %p250
      %p252 = scmp.ne.s32.totalorder %s243, %s244
      %p253 = scmp.eq.s32.totalorder %s23, 0
      %p254 = por %p252, %p253
      %p255 = scmp.ne.s32.totalorder %s243, %s244
      %p256 = scmp.eq.s32.totalorder %s24, 1
      %p257 = por %p255, %p256
      %p259 = scmp.ne.s32.totalorder %s244, %s258
      %p260 = scmp.eq.s32.totalorder %s24, 0
      %p261 = por %p259, %p260
      %s263 = sadd.s32 %s262, 1
      %p266 = scmp.eq.s32.totalorder %s18, 1
      %p267 = scmp.ne.s32.totalorder %s262, %s264
      %p268 = scmp.eq.s32.totalorder %s18, 0
      %p269 = por %p267, %p268
      %p270 = scmp.ne.s32.totalorder %s262, %s264
      %p271 = scmp.eq.s32.totalorder %s23, 1
      %p272 = por %p270, %p271
      %p273 = scmp.ne.s32.totalorder %s264, %s265
      %p274 = scmp.eq.s32.totalorder %s23, 0
      %p275 = por %p273, %p274
      %p276 = scmp.ne.s32.totalorder %s264, %s265
      %p277 = scmp.eq.s32.totalorder %s24, 1
      %p278 = por %p276, %p277
      %p280 = scmp.ne.s32.totalorder %s265, %s279
      %p281 = scmp.eq.s32.totalorder %s24, 0
      %p282 = por %p280, %p281
      %p283 = scmp.le.s32.totalorder 1, %s18
      %p284 = scmp.lt.s32.totalorder %s18, 3
      %p285 = pnand %p283, %p284
      %p286 = pneg %p285
      // Predicated region
      $region9: #{dgcnn2_forward.3} parent=5 // pred_check
        _
      $region10: #{dgcnn2_forward.3} parent=5 // pred_check_branch
        %288 = sbr.rel (%p285) target = $region12
      $region11: #{dgcnn2_forward.3} parent=5 // pred_region
        %s289 = ssub.s32 %s18, 1
        // Predicated region
        $region13: #{dgcnn2_forward.3} parent=11 // pred_check
          %p290 = pneg %p65
        $region14: #{dgcnn2_forward.3} parent=11 // pred_check_branch
          %292 = sbr.rel (%p290) target = $region16
        $region15: #{dgcnn2_forward.3} parent=11 // pred_region
          _
        $region16: #{dgcnn2_forward.3} parent=11 // pred_fallthru
          _
        // Predicated region
        $region17: #{dgcnn2_forward.3} parent=11 // pred_check
          %p293 = pneg %p86
        $region18: #{dgcnn2_forward.3} parent=11 // pred_check_branch
          %295 = sbr.rel (%p293) target = $region20
        $region19: #{dgcnn2_forward.3} parent=11 // pred_region
          _
        $region20: #{dgcnn2_forward.3} parent=11 // pred_fallthru
          _
        // Predicated region
        $region21: #{dgcnn2_forward.3} parent=11 // pred_check
          %p296 = pneg %p107
        $region22: #{dgcnn2_forward.3} parent=11 // pred_check_branch
          %298 = sbr.rel (%p296) target = $region24
        $region23: #{dgcnn2_forward.3} parent=11 // pred_region
          _
        $region24: #{dgcnn2_forward.3} parent=11 // pred_fallthru
          _
        // Predicated region
        $region25: #{dgcnn2_forward.3} parent=11 // pred_check
          %p299 = pneg %p128
        $region26: #{dgcnn2_forward.3} parent=11 // pred_check_branch
          %301 = sbr.rel (%p299) target = $region28
        $region27: #{dgcnn2_forward.3} parent=11 // pred_region
          _
        $region28: #{dgcnn2_forward.3} parent=11 // pred_fallthru
          _
        // Predicated region
        $region29: #{dgcnn2_forward.3} parent=11 // pred_check
          %p302 = pneg %p149
        $region30: #{dgcnn2_forward.3} parent=11 // pred_check_branch
          %304 = sbr.rel (%p302) target = $region32
        $region31: #{dgcnn2_forward.3} parent=11 // pred_region
          _
        $region32: #{dgcnn2_forward.3} parent=11 // pred_fallthru
          _
        // Predicated region
        $region33: #{dgcnn2_forward.3} parent=11 // pred_check
          %p305 = pneg %p170
        $region34: #{dgcnn2_forward.3} parent=11 // pred_check_branch
          %307 = sbr.rel (%p305) target = $region36
        $region35: #{dgcnn2_forward.3} parent=11 // pred_region
          _
        $region36: #{dgcnn2_forward.3} parent=11 // pred_fallthru
          _
        // Predicated region
        $region37: #{dgcnn2_forward.3} parent=11 // pred_check
          %p308 = pneg %p191
        $region38: #{dgcnn2_forward.3} parent=11 // pred_check_branch
          %310 = sbr.rel (%p308) target = $region40
        $region39: #{dgcnn2_forward.3} parent=11 // pred_region
          _
        $region40: #{dgcnn2_forward.3} parent=11 // pred_fallthru
          _
        // Predicated region
        $region41: #{dgcnn2_forward.3} parent=11 // pred_check
          %p311 = pneg %p212
        $region42: #{dgcnn2_forward.3} parent=11 // pred_check_branch
          %313 = sbr.rel (%p311) target = $region44
        $region43: #{dgcnn2_forward.3} parent=11 // pred_region
          _
        $region44: #{dgcnn2_forward.3} parent=11 // pred_fallthru
          _
        // Predicated region
        $region45: #{dgcnn2_forward.3} parent=11 // pred_check
          %p314 = pneg %p233
        $region46: #{dgcnn2_forward.3} parent=11 // pred_check_branch
          %316 = sbr.rel (%p314) target = $region48
        $region47: #{dgcnn2_forward.3} parent=11 // pred_region
          _
        $region48: #{dgcnn2_forward.3} parent=11 // pred_fallthru
          _
        // Predicated region
        $region49: #{dgcnn2_forward.3} parent=11 // pred_check
          %p317 = pneg %p254
        $region50: #{dgcnn2_forward.3} parent=11 // pred_check_branch
          %319 = sbr.rel (%p317) target = $region52
        $region51: #{dgcnn2_forward.3} parent=11 // pred_region
          _
        $region52: #{dgcnn2_forward.3} parent=11 // pred_fallthru
          _
      $region12: #{dgcnn2_forward.3} parent=5 // pred_fallthru
        _
      %p320 = scmp.lt.s32.totalorder %s18, 2
      // Predicated region
      $region53: #{dgcnn2_forward.3} parent=5 // pred_check
        %p321 = pneg %p320
      $region54: #{dgcnn2_forward.3} parent=5 // pred_check_branch
        %323 = sbr.rel (%p321) target = $region56
      $region55: #{dgcnn2_forward.3} parent=5 // pred_region
        // Predicated region
        $region57: #{dgcnn2_forward.3} parent=55 // pred_check
          %p324 = pneg %p38
        $region58: #{dgcnn2_forward.3} parent=55 // pred_check_branch
          %326 = sbr.rel (%p324) target = $region60
        $region59: #{dgcnn2_forward.3} parent=55 // pred_region
          %p327 = scmp.lt.s32.totalorder %s18, 1
          %s328 = scalar_select %p327, %s18, 1
          %s329 = smul.addr %s328, 8
          %s330 = scalar_lea.vmem %s0, %s329
        $region60: #{dgcnn2_forward.3} parent=55 // pred_fallthru
          _
      $region56: #{dgcnn2_forward.3} parent=5 // pred_fallthru
        _
      %p331 = scmp.le.s32.totalorder 1, %s18
      %p332 = scmp.lt.s32.totalorder %s18, 3
      %p333 = pnand %p331, %p332
      %p334 = pneg %p333
      // Predicated region
      $region61: #{dgcnn2_forward.3} parent=5 // pred_check
        _
      $region62: #{dgcnn2_forward.3} parent=5 // pred_check_branch
        %336 = sbr.rel (%p333) target = $region64
      $region63: #{dgcnn2_forward.3} parent=5 // pred_region
        %s337 = ssub.s32 %s18, 1
        %p338 = scmp.lt.s32.totalorder %s23, 1
        %s339 = scalar_select %p338, %s23, 1
        %s340 = smul.addr %s339, 8
        %s341 = scalar_lea.vmem %s0, %s340
        %p342 = pneg %p44
        %p343 = pneg %p41
        %p344 = pneg %p65
        %p345 = pneg %p62
        %p346 = pneg %p86
        %p347 = pneg %p83
        %p348 = pneg %p107
        %p349 = pneg %p104
        %p350 = pneg %p128
        %p351 = pneg %p125
        %p352 = pneg %p149
        %p353 = pneg %p146
        %p354 = pneg %p170
        %p355 = pneg %p167
        %p356 = pneg %p191
        %p357 = pneg %p188
        %p358 = pneg %p212
        %p359 = pneg %p209
        %p360 = pneg %p233
        %p361 = pneg %p230
        %p362 = pneg %p254
        %p363 = pneg %p251
        %p364 = pneg %p275
        %p365 = pneg %p272
        %p366 = scmp.lt.s32.totalorder %s23, 1
        %s367 = scalar_select %p366, %s23, 1
        %s368 = smul.addr %s367, 8
        %s369 = scalar_lea.vmem %s0, %s368
        %p370 = scmp.eq.s32.totalorder %s23, 0
        // Predicated region
        $region65: #{dgcnn2_forward.3} parent=63 // pred_check
          %p371 = pneg %p370
        $region66: #{dgcnn2_forward.3} parent=63 // pred_check_branch
          %373 = sbr.rel (%p371) target = $region68
        $region67: #{dgcnn2_forward.3} parent=63 // pred_region
          %vm374 = vcmask 253952
          %375 = vst.msk [vmem:[#allocation2] sm:$0x1] %vm374, 0.0
        $region68: #{dgcnn2_forward.3} parent=63 // pred_fallthru
          _
        %v376 = vld [vmem:[%s369] sm:$0x1f]
        %s377 = smul.u32 %s23, 4
        %s378 = scalar_lea.vmem %s1, %s377
        %v379 = vld [vmem:[%s378] sm:$0x7]
        %s380 = scalar_lea.vmem %s2, %s377
        %v381 = vld [vmem:[%s380] sm:$0x7]
        %382 = vrot.lane.b32.xlu0 %v376, 127
        %v383 = vpop.permute.xlu0 %382
        %384 = vrot.lane.b32.xlu0 %v376, 126
        %v385 = vpop.permute.xlu0 %384
        %v387 = vrot.slane %v383, 3
        %v390 = vrot.slane %v385, 6
        %vm392 = vcmask 1044480
        %v393 = vsel %vm392, %v376, %v387
        %vm394 = vcmask 1041408
        %v395 = vsel %vm394, %v387, %v390
        %397 = vset.pattern.permute.xlu0 0
        %398 = vperm.xlu0 %397, %v381
        %v399 = vpop.permute.xlu0 %398
        %vm401 = vcmask 121856
        %v403 = vsel %vm401, %v379, 0
        %vm405 = vcmask 1046528
        %v407 = vsel %vm405, %v395, 0
        %409 = vmatprep.subr.mxu0 0.0
        %410 = vmatpush1.msra.mxu0 %v393
        %411 = vmatprep.subr.mxu0 0.0
        %412 = vmatpush1.msra.mxu0 %v407
        %413 = vmatprep.subr.mxu0 0.0
        %414 = vmatpush1.msra.mxu0 0.0
        %415 = vmatprep.subr.mxu0 0.0
        %416 = vmatpush1.msra.mxu0 0.0
        %417 = vmatprep.subr.mxu0 0.0
        %418 = vmatpush1.msra.mxu0 0.0
        %419 = vmatprep.subr.mxu0 0.0
        %420 = vmatpush1.msra.mxu0 0.0
        %421 = vmatprep.subr.mxu0 0.0
        %422 = vmatpush1.msra.mxu0 0.0
        %423 = vmatprep.subr.mxu0 0.0
        %424 = vmatpush1.msra.mxu0 0.0
        %425 = vmatprep.subr.mxu0 0.0
        %426 = vmatpush1.msra.mxu0 0.0
        %427 = vmatprep.subr.mxu0 0.0
        %428 = vmatpush1.msra.mxu0 0.0
        %429 = vmatprep.subr.mxu0 0.0
        %430 = vmatpush1.msra.mxu0 0.0
        %431 = vmatprep.subr.mxu0 0.0
        %432 = vmatpush1.msra.mxu0 0.0
        %433 = vmatprep.subr.mxu0 0.0
        %434 = vmatpush1.msra.mxu0 0.0
        %435 = vmatprep.subr.mxu0 0.0
        %436 = vmatpush1.msra.mxu0 0.0
        %437 = vmatprep.subr.mxu0 0.0
        %438 = vmatpush1.msra.mxu0 0.0
        %439 = vmatprep.subr.mxu0 0.0
        %440 = vmatpush1.msra.mxu0 0.0
        %441 = vmatprep.subr.mxu0 0.0
        %442 = vmatpush1.msra.mxu0 0.0
        %443 = vmatprep.subr.mxu0 0.0
        %444 = vmatpush1.msra.mxu0 0.0
        %445 = vmatprep.subr.mxu0 0.0
        %446 = vmatpush1.msra.mxu0 0.0
        %447 = vmatprep.subr.mxu0 0.0
        %448 = vmatpush1.msra.mxu0 0.0
        %449 = vmatprep.subr.mxu0 0.0
        %450 = vmatpush1.msra.mxu0 0.0
        %451 = vmatprep.subr.mxu0 0.0
        %452 = vmatpush1.msra.mxu0 0.0
        %453 = vmatprep.subr.mxu0 0.0
        %454 = vmatpush1.msra.mxu0 0.0
        %455 = vmatprep.subr.mxu0 0.0
        %456 = vmatpush1.msra.mxu0 0.0
        %457 = vmatprep.subr.mxu0 0.0
        %458 = vmatpush1.msra.mxu0 0.0
        %459 = vmatprep.subr.mxu0 0.0
        %460 = vmatpush1.msra.mxu0 0.0
        %461 = vmatprep.subr.mxu0 0.0
        %462 = vmatpush1.msra.mxu0 0.0
        %463 = vmatprep.subr.mxu0 0.0
        %464 = vmatpush1.msra.mxu0 0.0
        %465 = vmatprep.subr.mxu0 0.0
        %466 = vmatpush1.msra.mxu0 0.0
        %467 = vmatprep.subr.mxu0 0.0
        %468 = vmatpush1.msra.mxu0 0.0
        %469 = vmatprep.subr.mxu0 0.0
        %470 = vmatpush1.msra.mxu0 0.0
        %471 = vmatprep.subr.mxu0 0.0
        %472 = vmatpush1.msra.mxu0 0.0
        %473 = vmatprep.mubr.f32.mxu0 0.0
        %474 = vmatmul.mubr.f32.gmra.mrb[0].mxu0 %v403
        %v475 = vpop.f32.mrb[0].mxu0
        %v476 = vadd.f32 %v399, %v475
        %v477 = vpop.f32.mrb[0].mxu0
        %478 = vdwg.mxu0
        %479 = vrot.lane.b32.xlu0 %v476, 127
        %v480 = vpop.permute.xlu0 %479
        %v481 = vmax.f32 %v476, %v480
        %482 = vrot.lane.b32.xlu0 %v476, 126
        %v483 = vpop.permute.xlu0 %482
        %v484 = vmax.f32 %v481, %v483
        %s485 = scalar_lea.vmem %s3, %s23
        %v486 = vld [vmem:[%s485] sm:$0x1]
        %s487 = scalar_lea.vmem %s4, %s23
        %v488 = vld [vmem:[%s487] sm:$0x1]
        %489 = vrot.lane.b32.xlu0 %v484, 127
        %v490 = vpop.permute.xlu0 %489
        %491 = vrot.lane.b32.xlu0 %v484, 126
        %v492 = vpop.permute.xlu0 %491
        %v494 = vrot.slane %v490, 5
        %v497 = vrot.slane %v492, 2
        %vm499 = vcmask 1042432
        %v500 = vsel %vm499, %v484, %v494
        %vm501 = vcmask 1045504
        %v502 = vsel %vm501, %v500, %v497
        %504 = vset.pattern.permute.xlu0 0
        %505 = vperm.xlu0 %504, %v488
        %v506 = vpop.permute.xlu0 %505
        %v508 = vlaneseq
        %v509 = vshrl.u32 %v508, 7
        %v510 = vsub.s32 0, %v509
        %v511 = vrot.slane %v506, %v510
        %vm512 = vcmask 72704
        %v514 = vsel %vm512, %v486, 0
        %vm516 = vcmask 1040384
        %v517 = vsel %vm516, %v497, 0
        %519 = vmatprep.subr.mxu0 0.0
        %520 = vmatpush1.msra.mxu0 %v502
        %521 = vmatprep.subr.mxu0 0.0
        %522 = vmatpush1.msra.mxu0 %v517
        %523 = vmatprep.subr.mxu0 0.0
        %524 = vmatpush1.msra.mxu0 0.0
        %525 = vmatprep.subr.mxu0 0.0
        %526 = vmatpush1.msra.mxu0 0.0
        %527 = vmatprep.subr.mxu0 0.0
        %528 = vmatpush1.msra.mxu0 0.0
        %529 = vmatprep.subr.mxu0 0.0
        %530 = vmatpush1.msra.mxu0 0.0
        %531 = vmatprep.subr.mxu0 0.0
        %532 = vmatpush1.msra.mxu0 0.0
        %533 = vmatprep.subr.mxu0 0.0
        %534 = vmatpush1.msra.mxu0 0.0
        %535 = vmatprep.subr.mxu0 0.0
        %536 = vmatpush1.msra.mxu0 0.0
        %537 = vmatprep.subr.mxu0 0.0
        %538 = vmatpush1.msra.mxu0 0.0
        %539 = vmatprep.subr.mxu0 0.0
        %540 = vmatpush1.msra.mxu0 0.0
        %541 = vmatprep.subr.mxu0 0.0
        %542 = vmatpush1.msra.mxu0 0.0
        %543 = vmatprep.subr.mxu0 0.0
        %544 = vmatpush1.msra.mxu0 0.0
        %545 = vmatprep.subr.mxu0 0.0
        %546 = vmatpush1.msra.mxu0 0.0
        %547 = vmatprep.subr.mxu0 0.0
        %548 = vmatpush1.msra.mxu0 0.0
        %549 = vmatprep.subr.mxu0 0.0
        %550 = vmatpush1.msra.mxu0 0.0
        %551 = vmatprep.subr.mxu0 0.0
        %552 = vmatpush1.msra.mxu0 0.0
        %553 = vmatprep.subr.mxu0 0.0
        %554 = vmatpush1.msra.mxu0 0.0
        %555 = vmatprep.subr.mxu0 0.0
        %556 = vmatpush1.msra.mxu0 0.0
        %557 = vmatprep.subr.mxu0 0.0
        %558 = vmatpush1.msra.mxu0 0.0
        %559 = vmatprep.subr.mxu0 0.0
        %560 = vmatpush1.msra.mxu0 0.0
        %561 = vmatprep.subr.mxu0 0.0
        %562 = vmatpush1.msra.mxu0 0.0
        %563 = vmatprep.subr.mxu0 0.0
        %564 = vmatpush1.msra.mxu0 0.0
        %565 = vmatprep.subr.mxu0 0.0
        %566 = vmatpush1.msra.mxu0 0.0
        %567 = vmatprep.subr.mxu0 0.0
        %568 = vmatpush1.msra.mxu0 0.0
        %569 = vmatprep.subr.mxu0 0.0
        %570 = vmatpush1.msra.mxu0 0.0
        %571 = vmatprep.subr.mxu0 0.0
        %572 = vmatpush1.msra.mxu0 0.0
        %573 = vmatprep.subr.mxu0 0.0
        %574 = vmatpush1.msra.mxu0 0.0
        %575 = vmatprep.subr.mxu0 0.0
        %576 = vmatpush1.msra.mxu0 0.0
        %577 = vmatprep.subr.mxu0 0.0
        %578 = vmatpush1.msra.mxu0 0.0
        %579 = vmatprep.subr.mxu0 0.0
        %580 = vmatpush1.msra.mxu0 0.0
        %581 = vmatprep.subr.mxu0 0.0
        %582 = vmatpush1.msra.mxu0 0.0
        %583 = vmatprep.mubr.f32.mxu0 0.0
        %584 = vmatmul.mubr.f32.gmra.mrb[0].mxu0 %v514
        %v585 = vpop.f32.mrb[0].mxu0
        %v586 = vadd.f32 %v511, %v585
        %v587 = vpop.f32.mrb[0].mxu0
        %588 = vdwg.mxu0
        %589 = vrot.lane.b32.xlu0 %v586, 127
        %v590 = vpop.permute.xlu0 %589
        %v591 = vmax.f32 %v586, %v590
        %592 = vrot.lane.b32.xlu0 %v586, 126
        %v593 = vpop.permute.xlu0 %592
        %v594 = vmax.f32 %v591, %v593
        %v595 = vlaneseq
        %v596 = vand.u32 %v595, 127
        %vm597 = vcmp.lt.s32.totalorder %v596, 24
        %v598 = vsel %vm597, %v594, 0.0
        %v599 = vld [vmem:[#allocation2] sm:$0x1]
        %s600 = smul.u32 %s23, 128
        %s601 = scalar_lea.vmem %s5, %s600
        %v602 = vld [vmem:[%s601] sm:$0xff]
        %v603 = vld [vmem:[%s601 + $0x8] sm:$0xff]
        %v604 = vld [vmem:[%s601 + $0x10] sm:$0xff]
        %v605 = vld [vmem:[%s601 + $0x18] sm:$0xff]
        %v606 = vld [vmem:[%s601 + $0x20] sm:$0xff]
        %v607 = vld [vmem:[%s601 + $0x28] sm:$0xff]
        %v608 = vld [vmem:[%s601 + $0x30] sm:$0xff]
        %v609 = vld [vmem:[%s601 + $0x38] sm:$0xff]
        %v610 = vld [vmem:[%s601 + $0x40] sm:$0xff]
        %v611 = vld [vmem:[%s601 + $0x48] sm:$0xff]
        %v612 = vld [vmem:[%s601 + $0x50] sm:$0xff]
        %v613 = vld [vmem:[%s601 + $0x58] sm:$0xff]
        %v614 = vld [vmem:[%s601 + $0x60] sm:$0xff]
        %v615 = vld [vmem:[%s601 + $0x68] sm:$0xff]
        %v616 = vld [vmem:[%s601 + $0x70] sm:$0xff]
        %v617 = vld [vmem:[%s601 + $0x78] sm:$0xff]
        %618 = vmatprep.subr.mxu0 0.0
        %619 = vmatpush1.msra.mxu0 %v602
        %620 = vmatprep.subr.mxu0 0.0
        %621 = vmatpush1.msra.mxu0 %v603
        %622 = vmatprep.subr.mxu0 0.0
        %623 = vmatpush1.msra.mxu0 %v604
        %624 = vmatprep.subr.mxu0 0.0
        %625 = vmatpush1.msra.mxu0 %v605
        %626 = vmatprep.subr.mxu0 0.0
        %627 = vmatpush1.msra.mxu0 %v606
        %628 = vmatprep.subr.mxu0 0.0
        %629 = vmatpush1.msra.mxu0 %v607
        %630 = vmatprep.subr.mxu0 0.0
        %631 = vmatpush1.msra.mxu0 %v608
        %632 = vmatprep.subr.mxu0 0.0
        %633 = vmatpush1.msra.mxu0 %v609
        %634 = vmatprep.subr.mxu0 0.0
        %635 = vmatpush1.msra.mxu0 %v610
        %636 = vmatprep.subr.mxu0 0.0
        %637 = vmatpush1.msra.mxu0 %v611
        %638 = vmatprep.subr.mxu0 0.0
        %639 = vmatpush1.msra.mxu0 %v612
        %640 = vmatprep.subr.mxu0 0.0
        %641 = vmatpush1.msra.mxu0 %v613
        %642 = vmatprep.subr.mxu0 0.0
        %643 = vmatpush1.msra.mxu0 %v614
        %644 = vmatprep.subr.mxu0 0.0
        %645 = vmatpush1.msra.mxu0 %v615
        %646 = vmatprep.subr.mxu0 0.0
        %647 = vmatpush1.msra.mxu0 %v616
        %648 = vmatprep.subr.mxu0 0.0
        %649 = vmatpush1.msra.mxu0 %v617
        %650 = vmatprep.subr.mxu0 0.0
        %651 = vmatpush1.msra.mxu0 0.0
        %652 = vmatprep.subr.mxu0 0.0
        %653 = vmatpush1.msra.mxu0 0.0
        %654 = vmatprep.subr.mxu0 0.0
        %655 = vmatpush1.msra.mxu0 0.0
        %656 = vmatprep.subr.mxu0 0.0
        %657 = vmatpush1.msra.mxu0 0.0
        %658 = vmatprep.subr.mxu0 0.0
        %659 = vmatpush1.msra.mxu0 0.0
        %660 = vmatprep.subr.mxu0 0.0
        %661 = vmatpush1.msra.mxu0 0.0
        %662 = vmatprep.subr.mxu0 0.0
        %663 = vmatpush1.msra.mxu0 0.0
        %664 = vmatprep.subr.mxu0 0.0
        %665 = vmatpush1.msra.mxu0 0.0
        %666 = vmatprep.subr.mxu0 0.0
        %667 = vmatpush1.msra.mxu0 0.0
        %668 = vmatprep.subr.mxu0 0.0
        %669 = vmatpush1.msra.mxu0 0.0
        %670 = vmatprep.subr.mxu0 0.0
        %671 = vmatpush1.msra.mxu0 0.0
        %672 = vmatprep.subr.mxu0 0.0
        %673 = vmatpush1.msra.mxu0 0.0
        %674 = vmatprep.subr.mxu0 0.0
        %675 = vmatpush1.msra.mxu0 0.0
        %676 = vmatprep.subr.mxu0 0.0
        %677 = vmatpush1.msra.mxu0 0.0
        %678 = vmatprep.subr.mxu0 0.0
        %679 = vmatpush1.msra.mxu0 0.0
        %680 = vmatprep.subr.mxu0 0.0
        %681 = vmatpush1.msra.mxu0 0.0
        %682 = vmatprep.mubr.f32.mxu0 0.0
        %683 = vmatmul.mubr.f32.gmra.mrb[0].mxu0 %v598
        %v684 = vpop.f32.mrb[0].mxu0
        %v685 = vadd.f32 0.0, %v684
        %v686 = vpop.f32.mrb[0].mxu0
        %687 = vdwg.mxu0
        %v688 = vadd.f32 %v599, %v685
        %vm689 = vcmask 253952
        %690 = vst.msk [vmem:[#allocation2] sm:$0x1] %vm689, %v688
        %p691 = scmp.eq.s32.totalorder %s23, 1
        // Predicated region
        $region69: #{dgcnn2_forward.3} parent=63 // pred_check
          %p692 = pneg %p691
        $region70: #{dgcnn2_forward.3} parent=63 // pred_check_branch
          %694 = sbr.rel (%p692) target = $region72
        $region71: #{dgcnn2_forward.3} parent=63 // pred_region
          %v695 = vld [vmem:[#allocation2] sm:$0x1]
          %v696 = vld [vmem:[%s6] sm:$0x1]
          %v697 = vadd.f32 %v695, %v696
          %vm698 = vcmp.gt.f32.partialorder %v697, 0.0
          %v699 = vmin.f32 %v697, 0.0
          %v700 = vmul.f32 %v699, 1.442695
          %v701 = vpow.pop %v700
          %v702 = vsub.f32 %v701, 1.0
          %v703 = vsel %vm698, %v697, %v702
          %v704 = vld [vmem:[%s7] sm:$0xff]
          %v705 = vld [vmem:[%s7 + $0x8] sm:$0xff]
          %v706 = vld [vmem:[%s7 + $0x10] sm:$0xff]
          %v707 = vld [vmem:[%s7 + $0x18] sm:$0xff]
          %v708 = vld [vmem:[%s8] sm:$0x1]
          %vm709 = vcmask 261120
          %v711 = vsel %vm709, %v703, 0
          %713 = vmatprep.subr.mxu0 0.0
          %714 = vmatpush1.msra.mxu0 %v704
          %715 = vmatprep.subr.mxu0 0.0
          %716 = vmatpush1.msra.mxu0 %v705
          %717 = vmatprep.subr.mxu0 0.0
          %718 = vmatpush1.msra.mxu0 %v706
          %719 = vmatprep.subr.mxu0 0.0
          %720 = vmatpush1.msra.mxu0 %v707
          %721 = vmatprep.subr.mxu0 0.0
          %722 = vmatpush1.msra.mxu0 0.0
          %723 = vmatprep.subr.mxu0 0.0
          %724 = vmatpush1.msra.mxu0 0.0
          %725 = vmatprep.subr.mxu0 0.0
          %726 = vmatpush1.msra.mxu0 0.0
          %727 = vmatprep.subr.mxu0 0.0
          %728 = vmatpush1.msra.mxu0 0.0
          %729 = vmatprep.subr.mxu0 0.0
          %730 = vmatpush1.msra.mxu0 0.0
          %731 = vmatprep.subr.mxu0 0.0
          %732 = vmatpush1.msra.mxu0 0.0
          %733 = vmatprep.subr.mxu0 0.0
          %734 = vmatpush1.msra.mxu0 0.0
          %735 = vmatprep.subr.mxu0 0.0
          %736 = vmatpush1.msra.mxu0 0.0
          %737 = vmatprep.subr.mxu0 0.0
          %738 = vmatpush1.msra.mxu0 0.0
          %739 = vmatprep.subr.mxu0 0.0
          %740 = vmatpush1.msra.mxu0 0.0
          %741 = vmatprep.subr.mxu0 0.0
          %742 = vmatpush1.msra.mxu0 0.0
          %743 = vmatprep.subr.mxu0 0.0
          %744 = vmatpush1.msra.mxu0 0.0
          %745 = vmatprep.subr.mxu0 0.0
          %746 = vmatpush1.msra.mxu0 0.0
          %747 = vmatprep.subr.mxu0 0.0
          %748 = vmatpush1.msra.mxu0 0.0
          %749 = vmatprep.subr.mxu0 0.0
          %750 = vmatpush1.msra.mxu0 0.0
          %751 = vmatprep.subr.mxu0 0.0
          %752 = vmatpush1.msra.mxu0 0.0
          %753 = vmatprep.subr.mxu0 0.0
          %754 = vmatpush1.msra.mxu0 0.0
          %755 = vmatprep.subr.mxu0 0.0
          %756 = vmatpush1.msra.mxu0 0.0
          %757 = vmatprep.subr.mxu0 0.0
          %758 = vmatpush1.msra.mxu0 0.0
          %759 = vmatprep.subr.mxu0 0.0
          %760 = vmatpush1.msra.mxu0 0.0
          %761 = vmatprep.subr.mxu0 0.0
          %762 = vmatpush1.msra.mxu0 0.0
          %763 = vmatprep.subr.mxu0 0.0
          %764 = vmatpush1.msra.mxu0 0.0
          %765 = vmatprep.subr.mxu0 0.0
          %766 = vmatpush1.msra.mxu0 0.0
          %767 = vmatprep.subr.mxu0 0.0
          %768 = vmatpush1.msra.mxu0 0.0
          %769 = vmatprep.subr.mxu0 0.0
          %770 = vmatpush1.msra.mxu0 0.0
          %771 = vmatprep.subr.mxu0 0.0
          %772 = vmatpush1.msra.mxu0 0.0
          %773 = vmatprep.subr.mxu0 0.0
          %774 = vmatpush1.msra.mxu0 0.0
          %775 = vmatprep.subr.mxu0 0.0
          %776 = vmatpush1.msra.mxu0 0.0
          %777 = vmatprep.mubr.f32.mxu0 0.0
          %778 = vmatmul.mubr.f32.gmra.mrb[0].mxu0 %v711
          %v779 = vpop.f32.mrb[0].mxu0
          %v780 = vadd.f32 %v708, %v779
          %v781 = vpop.f32.mrb[0].mxu0
          %782 = vdwg.mxu0
          %vm783 = vcmp.gt.f32.partialorder %v780, 0.0
          %v784 = vmin.f32 %v780, 0.0
          %v785 = vmul.f32 %v784, 1.442695
          %v786 = vpow.pop %v785
          %v787 = vsub.f32 %v786, 1.0
          %v788 = vsel %vm783, %v780, %v787
          %v789 = vld [vmem:[%s9] sm:$0x3f]
          %v790 = vld [vmem:[%s10] sm:$0x1]
          %vm791 = vcmask 48128
          %v793 = vsel %vm791, %v788, 0
          %v796 = vsel %vm501, %v789, 0
          %798 = vmatprep.subr.mxu0 0.0
          %799 = vmatpush1.msra.mxu0 %v796
          %800 = vmatprep.subr.mxu0 0.0
          %801 = vmatpush1.msra.mxu0 0.0
          %802 = vmatprep.subr.mxu0 0.0
          %803 = vmatpush1.msra.mxu0 0.0
          %804 = vmatprep.subr.mxu0 0.0
          %805 = vmatpush1.msra.mxu0 0.0
          %806 = vmatprep.subr.mxu0 0.0
          %807 = vmatpush1.msra.mxu0 0.0
          %808 = vmatprep.subr.mxu0 0.0
          %809 = vmatpush1.msra.mxu0 0.0
          %810 = vmatprep.subr.mxu0 0.0
          %811 = vmatpush1.msra.mxu0 0.0
          %812 = vmatprep.subr.mxu0 0.0
          %813 = vmatpush1.msra.mxu0 0.0
          %814 = vmatprep.subr.mxu0 0.0
          %815 = vmatpush1.msra.mxu0 0.0
          %816 = vmatprep.subr.mxu0 0.0
          %817 = vmatpush1.msra.mxu0 0.0
          %818 = vmatprep.subr.mxu0 0.0
          %819 = vmatpush1.msra.mxu0 0.0
          %820 = vmatprep.subr.mxu0 0.0
          %821 = vmatpush1.msra.mxu0 0.0
          %822 = vmatprep.subr.mxu0 0.0
          %823 = vmatpush1.msra.mxu0 0.0
          %824 = vmatprep.subr.mxu0 0.0
          %825 = vmatpush1.msra.mxu0 0.0
          %826 = vmatprep.subr.mxu0 0.0
          %827 = vmatpush1.msra.mxu0 0.0
          %828 = vmatprep.subr.mxu0 0.0
          %829 = vmatpush1.msra.mxu0 0.0
          %830 = vmatprep.subr.mxu0 0.0
          %831 = vmatpush1.msra.mxu0 0.0
          %832 = vmatprep.subr.mxu0 0.0
          %833 = vmatpush1.msra.mxu0 0.0
          %834 = vmatprep.subr.mxu0 0.0
          %835 = vmatpush1.msra.mxu0 0.0
          %836 = vmatprep.subr.mxu0 0.0
          %837 = vmatpush1.msra.mxu0 0.0
          %838 = vmatprep.subr.mxu0 0.0
          %839 = vmatpush1.msra.mxu0 0.0
          %840 = vmatprep.subr.mxu0 0.0
          %841 = vmatpush1.msra.mxu0 0.0
          %842 = vmatprep.subr.mxu0 0.0
          %843 = vmatpush1.msra.mxu0 0.0
          %844 = vmatprep.subr.mxu0 0.0
          %845 = vmatpush1.msra.mxu0 0.0
          %846 = vmatprep.subr.mxu0 0.0
          %847 = vmatpush1.msra.mxu0 0.0
          %848 = vmatprep.subr.mxu0 0.0
          %849 = vmatpush1.msra.mxu0 0.0
          %850 = vmatprep.subr.mxu0 0.0
          %851 = vmatpush1.msra.mxu0 0.0
          %852 = vmatprep.subr.mxu0 0.0
          %853 = vmatpush1.msra.mxu0 0.0
          %854 = vmatprep.subr.mxu0 0.0
          %855 = vmatpush1.msra.mxu0 0.0
          %856 = vmatprep.subr.mxu0 0.0
          %857 = vmatpush1.msra.mxu0 0.0
          %858 = vmatprep.subr.mxu0 0.0
          %859 = vmatpush1.msra.mxu0 0.0
          %860 = vmatprep.subr.mxu0 0.0
          %861 = vmatpush1.msra.mxu0 0.0
          %862 = vmatprep.mubr.f32.mxu0 0.0
          %863 = vmatmul.mubr.f32.gmra.mrb[0].mxu0 %v793
          %v864 = vpop.f32.mrb[0].mxu0
          %v865 = vadd.f32 %v790, %v864
          %v866 = vpop.f32.mrb[0].mxu0
          %867 = vdwg.mxu0
          %vm868 = vcmask 8192
          %869 = vst.msk [vmem:[#allocation3] sm:$0x1] %vm868, %v865
        $region72: #{dgcnn2_forward.3} parent=63 // pred_fallthru
          _
        // Predicated region
        $region73: #{dgcnn2_forward.3} parent=63 // pred_check
          %p870 = pneg %p272
        $region74: #{dgcnn2_forward.3} parent=63 // pred_check_branch
          %872 = sbr.rel (%p870) target = $region76
        $region75: #{dgcnn2_forward.3} parent=63 // pred_region
          %s874 = ssub.s32 16, 16
          %875 = vsyncadd [#allocation4], %s874
          %s877 = sshll.u32 [#allocation3], 4
          %s878 = int_to_ptr.vmem [resolvable:$true] %s877
          %880 = dma.vmem_to_hbm [thread:$0]  %s878, 16, %s11, [#allocation4]
        $region76: #{dgcnn2_forward.3} parent=63 // pred_fallthru
          _
        // Predicated region
        $region77: #{dgcnn2_forward.3} parent=63 // pred_check
          %p881 = pneg %p272
        $region78: #{dgcnn2_forward.3} parent=63 // pred_check_branch
          %883 = sbr.rel (%p881) target = $region80
        $region79: #{dgcnn2_forward.3} parent=63 // pred_region
          %884 = dma.done [#allocation4], 16
        $region80: #{dgcnn2_forward.3} parent=63 // pred_fallthru
          _
      $region64: #{dgcnn2_forward.3} parent=5 // pred_fallthru
        _
      %p885 = scmp.le.s32.totalorder 2, %s18
      // Predicated region
      $region81: #{dgcnn2_forward.3} parent=5 // pred_check
        %p886 = pneg %p885
      $region82: #{dgcnn2_forward.3} parent=5 // pred_check_branch
        %888 = sbr.rel (%p886) target = $region84
      $region83: #{dgcnn2_forward.3} parent=5 // pred_region
        %s889 = ssub.s32 %s18, 2
      $region84: #{dgcnn2_forward.3} parent=5 // pred_fallthru
        _
    $region6: #{dgcnn2_forward.3} parent=1 // loop_footer
      %s22 = sadd.s32 1, %s18
    $region7: #{dgcnn2_forward.3} parent=1 // loop_footer_branch
      %17 = sbr.rel target = $region3
    $region8: #{dgcnn2_forward.3} parent=1 // loop_exit
      _
    %890 = vsyncpa [#allocation4], 1
    %s891 = scalar_lea.sflag [#allocation4], 1
    %892 = vsyncpa %s891, 1

</llo_original>
